<compile_context>
chip_gen: v7x
topology: tpu7x:2x2x1
jax: 0.10.0
libtpu: 0.0.40
codegen_flags: <defaults>
</compile_context>

<pallas_src>
import jax
import jax.numpy as jnp
from jax.experimental import pallas as pl
from jax.experimental.pallas import tpu as pltpu


# ---------------------------------------------------------------------------
# Kernel 1: fused 3-tap conv + masked piecewise max pooling + ReLU (3 branches)
# ---------------------------------------------------------------------------
def _branch_kernel(emb_ref, mask_ref,
                   ws_ref, bs_ref, wo_ref, bo_ref, wc_ref, bc_ref,
                   sbj_ref, obj_ref, ctx_ref):
    f32 = jnp.float32
    emb = emb_ref[...].astype(f32)            # (TB, L, D)
    mask = mask_ref[...].astype(f32)          # (TB, L, 3)
    tb, seq_len, dim = emb.shape

    # Build the 3-tap window [x[t-1], x[t], x[t+1]] once (zero padded at both
    # sequence ends, matching Conv2d padding=(1, 0)); shared by all 3 branches.
    zero_row = jnp.zeros_like(emb[:, :1, :])
    left = jnp.concatenate([zero_row, emb[:, :-1, :]], axis=1)     # x[t-1]
    right = jnp.concatenate([emb[:, 1:, :], zero_row], axis=1)     # x[t+1]
    x3 = jnp.concatenate([left, emb, right], axis=2)               # (TB, L, 3D)
    x3 = x3.reshape(tb * seq_len, 3 * dim)

    m0 = mask[:, :, 0:1]                                           # (TB, L, 1)
    m1 = mask[:, :, 1:2]
    m2 = mask[:, :, 2:3]

    def branch(w_ref_, b_ref_, part_masks, out_ref_):
        hidden = b_ref_.shape[-1]
        conv = jnp.dot(x3, w_ref_[...], preferred_element_type=f32)
        conv = conv.reshape(tb, seq_len, hidden) + b_ref_[...].reshape(1, 1, hidden)
        # masked piecewise max over the sequence (sublane) axis, then -100, ReLU
        parts = [jnp.max(conv + pm, axis=1) - 100.0 for pm in part_masks]
        out = jnp.maximum(jnp.concatenate(parts, axis=1), 0.0)     # (TB, P*H) blocked
        out_ref_[...] = out.astype(out_ref_.dtype)

    branch(ws_ref, bs_ref, [m0, m1 + m2], sbj_ref)   # _SOCNN(is_head=True)
    branch(wo_ref, bo_ref, [m0 + m1, m2], obj_ref)   # _SOCNN(is_head=False)
    branch(wc_ref, bc_ref, [m0, m1, m2], ctx_ref)    # PCNN (3 pieces)


# ---------------------------------------------------------------------------
# Kernel 2: fused Linear + ReLU heads (soc_ffn1 -> soc_ffn2, context_ffn)
# ---------------------------------------------------------------------------
def _head_kernel(soc_ref, ctx_ref,
                 w1_ref, b1_ref, w2_ref, b2_ref, wf_ref, bf_ref,
                 soc_out_ref, ctx_out_ref):
    f32 = jnp.float32
    soc = soc_ref[...].astype(f32)
    h1 = jnp.dot(soc, w1_ref[...], preferred_element_type=f32) + b1_ref[...]
    h1 = jnp.maximum(h1, 0.0)
    h2 = jnp.dot(h1, w2_ref[...], preferred_element_type=f32) + b2_ref[...]
    soc_out_ref[...] = jnp.maximum(h2, 0.0).astype(soc_out_ref.dtype)

    ctx = ctx_ref[...].astype(f32)
    hc = jnp.dot(ctx, wf_ref[...], preferred_element_type=f32) + bf_ref[...]
    ctx_out_ref[...] = jnp.maximum(hc, 0.0).astype(ctx_out_ref.dtype)


def _pick_batch_tile(batch, row_bytes, target_bytes=4 << 20):
    """Batch rows per grid step: full batch when tiny, else a multiple of 8 sized
    so the per-step input tile lands around a few MiB (HBM-roofline friendly)."""
    if batch <= 8:
        return batch
    tb = max(8, min(batch, target_bytes // max(row_bytes, 1)))
    tb -= tb % 8
    return max(8, min(tb, batch))


def semantic_embedding_forward(embedding, mask, params):
    """Pallas equivalent of SemanticEmbedding.forward(embedding), with config.mask
    passed explicitly.  embedding: (B, max_length, model_dim); mask: (B, max_length, 3).
    Returns (soc_embedding, context_embedding), each (B, hidden_size)."""
    B, L, D = embedding.shape
    H = params["bs"].shape[0]
    dt = embedding.dtype

    # Conv weights (torch layout (H, 3, D)) -> (3*D, H) matching the in-kernel
    # [x[t-1], x[t], x[t+1]] window layout.
    def conv_w(w):
        return jnp.transpose(w, (1, 2, 0)).reshape(3 * D, H).astype(dt)

    ws, wo, wc = conv_w(params["Ws"]), conv_w(params["Wo"]), conv_w(params["Wc"])
    bs = params["bs"].reshape(1, H).astype(dt)
    bo = params["bo"].reshape(1, H).astype(dt)
    bc = params["bc"].reshape(1, H).astype(dt)
    mask = mask.astype(dt)

    row_bytes = L * (D + 3) * jnp.dtype(dt).itemsize
    TB = _pick_batch_tile(B, row_bytes)
    grid = (pl.cdiv(B, TB),)

    cparams = pltpu.CompilerParams(
        dimension_semantics=("parallel",),
        vmem_limit_bytes=64 * 1024 * 1024,
    )

    sbj, obj, ctx = pl.pallas_call(
        _branch_kernel,
        out_shape=(
            jax.ShapeDtypeStruct((B, 2 * H), dt),
            jax.ShapeDtypeStruct((B, 2 * H), dt),
            jax.ShapeDtypeStruct((B, 3 * H), dt),
        ),
        grid_spec=pltpu.PrefetchScalarGridSpec(
            num_scalar_prefetch=0,
            grid=grid,
            in_specs=[
                pl.BlockSpec((TB, L, D), lambda b: (b, 0, 0)),   # embedding
                pl.BlockSpec((TB, L, 3), lambda b: (b, 0, 0)),   # piecewise mask
                pl.BlockSpec((3 * D, H), lambda b: (0, 0)),      # subject conv W
                pl.BlockSpec((1, H), lambda b: (0, 0)),          # subject conv b
                pl.BlockSpec((3 * D, H), lambda b: (0, 0)),      # object conv W
                pl.BlockSpec((1, H), lambda b: (0, 0)),          # object conv b
                pl.BlockSpec((3 * D, H), lambda b: (0, 0)),      # context conv W
                pl.BlockSpec((1, H), lambda b: (0, 0)),          # context conv b
            ],
            out_specs=[
                pl.BlockSpec((TB, 2 * H), lambda b: (b, 0)),
                pl.BlockSpec((TB, 2 * H), lambda b: (b, 0)),
                pl.BlockSpec((TB, 3 * H), lambda b: (b, 0)),
            ],
        ),
        compiler_params=cparams,
    )(embedding, mask, ws, bs, wo, bo, wc, bc)

    # torch's `.view(-1, parts*H)` interleaves as [h0p0, h0p1, h1p0, ...]; the
    # kernel emits part-blocked slabs, so reorder here (tiny layout plumbing).
    def interleave(x, parts):
        return x.reshape(B, parts, H).transpose(0, 2, 1).reshape(B, parts * H)

    sbj_out = interleave(sbj, 2)
    obj_out = interleave(obj, 2)
    ctx_out = interleave(ctx, 3)
    soc_in = jnp.concatenate([sbj_out, obj_out], axis=1)           # (B, 4H)

    w1 = params["W1"].T.astype(dt)                                 # (4H, 3H)
    b1 = params["b1"].reshape(1, 3 * H).astype(dt)
    w2 = params["W2"].T.astype(dt)                                 # (3H, H)
    b2 = params["b2"].reshape(1, H).astype(dt)
    wf = params["Wfc"].T.astype(dt)                                # (3H, H)
    bf = params["bfc"].reshape(1, H).astype(dt)

    soc_emb, ctx_emb = pl.pallas_call(
        _head_kernel,
        out_shape=(
            jax.ShapeDtypeStruct((B, H), dt),
            jax.ShapeDtypeStruct((B, H), dt),
        ),
        grid_spec=pltpu.PrefetchScalarGridSpec(
            num_scalar_prefetch=0,
            grid=grid,
            in_specs=[
                pl.BlockSpec((TB, 4 * H), lambda b: (b, 0)),
                pl.BlockSpec((TB, 3 * H), lambda b: (b, 0)),
                pl.BlockSpec((4 * H, 3 * H), lambda b: (0, 0)),
                pl.BlockSpec((1, 3 * H), lambda b: (0, 0)),
                pl.BlockSpec((3 * H, H), lambda b: (0, 0)),
                pl.BlockSpec((1, H), lambda b: (0, 0)),
                pl.BlockSpec((3 * H, H), lambda b: (0, 0)),
                pl.BlockSpec((1, H), lambda b: (0, 0)),
            ],
            out_specs=[
                pl.BlockSpec((TB, H), lambda b: (b, 0)),
                pl.BlockSpec((TB, H), lambda b: (b, 0)),
            ],
        ),
        compiler_params=cparams,
    )(soc_in, ctx_out, w1, b1, w2, b2, wf, bf)

    return soc_emb, ctx_emb


# ---------------------------------------------------------------------------
# Pure-JAX reference mirroring the PyTorch module exactly
# ---------------------------------------------------------------------------
def semantic_embedding_reference(embedding, mask, params):
    B, L, D = embedding.shape
    relu = jax.nn.relu

    padded = jnp.pad(embedding, ((0, 0), (1, 1), (0, 0)))
    windows = jnp.stack([padded[:, k:k + L, :] for k in range(3)], axis=2)  # (B,L,3,D)

    def conv(w, b):                 # Conv2d(1, H, (3, D), padding=(1,0)) -> (B, H, L)
        return jnp.einsum("blkd,hkd->bhl", windows, w) + b[None, :, None]

    def pool(x, part_masks):        # masked piecewise max, torch .view(-1, P*H) order
        parts = [jnp.max(x + pm[:, None, :], axis=2) - 100.0 for pm in part_masks]
        return jnp.stack(parts, axis=-1).reshape(B, -1)

    m0, m1, m2 = mask[..., 0], mask[..., 1], mask[..., 2]
    sbj = relu(pool(conv(params["Ws"], params["bs"]), [m0, m1 + m2]))
    obj = relu(pool(conv(params["Wo"], params["bo"]), [m0 + m1, m2]))
    ctx = relu(pool(conv(params["Wc"], params["bc"]), [m0, m1, m2]))

    soc = jnp.concatenate([sbj, obj], axis=1)
    soc = relu(soc @ params["W1"].T + params["b1"])
    soc_emb = relu(soc @ params["W2"].T + params["b2"])
    ctx_emb = relu(ctx @ params["Wfc"].T + params["bfc"])
    return soc_emb, ctx_emb


if __name__ == "__main__":
    key = jax.random.PRNGKey(0)
    # Small config: batch=4, max_length=24, model_dim=word_size+2*pos_size=16,
    # hidden_size=32, window_size=3.
    B, L, D, H = 4, 24, 16, 32
    ks = jax.random.split(key, 13)
    f32 = jnp.float32

    embedding = jax.random.normal(ks[0], (B, L, D), f32)

    # config.mask: classic PCNN piece mask, 100 inside each of the 3 pieces, else 0.
    e1 = jnp.array([6, 8, 5, 10])
    e2 = jnp.array([14, 16, 12, 18])
    t = jnp.arange(L)[None, :]
    pieces = jnp.stack(
        [t < e1[:, None],
         (t >= e1[:, None]) & (t < e2[:, None]),
         t >= e2[:, None]], axis=-1)
    mask = 100.0 * pieces.astype(f32)                              # (B, L, 3)

    def rnd(k, shape, scale=0.1):
        return scale * jax.random.normal(k, shape, f32)

    params = dict(
        Ws=rnd(ks[1], (H, 3, D)), bs=rnd(ks[2], (H,)),
        Wo=rnd(ks[3], (H, 3, D)), bo=rnd(ks[4], (H,)),
        Wc=rnd(ks[5], (H, 3, D)), bc=rnd(ks[6], (H,)),
        W1=rnd(ks[7], (3 * H, 4 * H)), b1=rnd(ks[8], (3 * H,)),
        W2=rnd(ks[9], (H, 3 * H)), b2=rnd(ks[10], (H,)),
        Wfc=rnd(ks[11], (H, 3 * H)), bfc=rnd(ks[12], (H,)),
    )

    fwd = jax.jit(semantic_embedding_forward)
    soc_emb, ctx_emb = jax.block_until_ready(fwd(embedding, mask, params))

    ref_soc, ref_ctx = semantic_embedding_reference(embedding, mask, params)
    assert soc_emb.shape == (B, H) and ctx_emb.shape == (B, H)
    assert jnp.allclose(soc_emb, ref_soc, atol=2e-2, rtol=2e-2), "soc_embedding mismatch"
    assert jnp.allclose(ctx_emb, ref_ctx, atol=2e-2, rtol=2e-2), "context_embedding mismatch"

    print("KERNEL_OK")
</pallas_src>

<mosaic_0001>
module attributes {stable_mosaic.version = 11 : i64} {
  func.func @_branch_kernel(%arg0: i32, %arg1: memref<4x24x16xf32, #tpu.memory_space<vmem>>, %arg2: memref<4x24x3xf32, #tpu.memory_space<vmem>>, %arg3: memref<48x32xf32, #tpu.memory_space<vmem>>, %arg4: memref<1x32xf32, #tpu.memory_space<vmem>>, %arg5: memref<48x32xf32, #tpu.memory_space<vmem>>, %arg6: memref<1x32xf32, #tpu.memory_space<vmem>>, %arg7: memref<48x32xf32, #tpu.memory_space<vmem>>, %arg8: memref<1x32xf32, #tpu.memory_space<vmem>>, %arg9: memref<4x64xf32, #tpu.memory_space<vmem>>, %arg10: memref<4x64xf32, #tpu.memory_space<vmem>>, %arg11: memref<4x96xf32, #tpu.memory_space<vmem>>) attributes {dimension_semantics = [#tpu.dimension_semantics<parallel>], iteration_bounds = array<i64: 1>, scalar_prefetch = 0 : i64, scratch_operands = 0 : i64, tpu.core_type = #tpu.core_type<tc>, window_params = [{transform_indices = @transform_0, window_bounds = array<i64: 4, 24, 16>}, {transform_indices = @transform_1, window_bounds = array<i64: 4, 24, 3>}, {pipeline_mode = #tpu.pipeline_mode<synchronous>, transform_indices = @transform_2, window_bounds = array<i64: 48, 32>}, {pipeline_mode = #tpu.pipeline_mode<synchronous>, transform_indices = @transform_3, window_bounds = array<i64: 1, 32>}, {pipeline_mode = #tpu.pipeline_mode<synchronous>, transform_indices = @transform_4, window_bounds = array<i64: 48, 32>}, {pipeline_mode = #tpu.pipeline_mode<synchronous>, transform_indices = @transform_5, window_bounds = array<i64: 1, 32>}, {pipeline_mode = #tpu.pipeline_mode<synchronous>, transform_indices = @transform_6, window_bounds = array<i64: 48, 32>}, {pipeline_mode = #tpu.pipeline_mode<synchronous>, transform_indices = @transform_7, window_bounds = array<i64: 1, 32>}, {transform_indices = @transform_8, window_bounds = array<i64: 4, 64>}, {transform_indices = @transform_9, window_bounds = array<i64: 4, 64>}, {transform_indices = @transform_10, window_bounds = array<i64: 4, 96>}]} {
    %c0 = arith.constant 0 : index
    %c0_0 = arith.constant 0 : index
    %c0_1 = arith.constant 0 : index
    %0 = vector.load %arg1[%c0, %c0_0, %c0_1] : memref<4x24x16xf32, #tpu.memory_space<vmem>>, vector<4x24x16xf32>
    %c0_2 = arith.constant 0 : index
    %c0_3 = arith.constant 0 : index
    %c0_4 = arith.constant 0 : index
    %1 = vector.load %arg2[%c0_2, %c0_3, %c0_4] : memref<4x24x3xf32, #tpu.memory_space<vmem>>, vector<4x24x3xf32>
    %cst = arith.constant 0.000000e+00 : f32
    %2 = vector.broadcast %cst : f32 to vector<4x1x16xf32>
    %3 = vector.extract_strided_slice %0 {offsets = [0, 0, 0], sizes = [4, 23, 16], strides = [1, 1, 1]} : vector<4x24x16xf32> to vector<4x23x16xf32>
    %4 = tpu.concatenate %2, %3 in 1 : vector<4x1x16xf32>, vector<4x23x16xf32> -> vector<4x24x16xf32>
    %5 = vector.extract_strided_slice %0 {offsets = [0, 1, 0], sizes = [4, 23, 16], strides = [1, 1, 1]} : vector<4x24x16xf32> to vector<4x23x16xf32>
    %6 = tpu.concatenate %5, %2 in 1 : vector<4x23x16xf32>, vector<4x1x16xf32> -> vector<4x24x16xf32>
    %7 = tpu.concatenate %4, %0, %6 in 2 : vector<4x24x16xf32>, vector<4x24x16xf32>, vector<4x24x16xf32> -> vector<4x24x48xf32>
    %8 = vector.shape_cast %7 : vector<4x24x48xf32> to vector<96x48xf32>
    %9 = vector.extract_strided_slice %1 {offsets = [0, 0, 0], sizes = [4, 24, 1], strides = [1, 1, 1]} : vector<4x24x3xf32> to vector<4x24x1xf32>
    %10 = vector.extract_strided_slice %1 {offsets = [0, 0, 1], sizes = [4, 24, 1], strides = [1, 1, 1]} : vector<4x24x3xf32> to vector<4x24x1xf32>
    %11 = vector.extract_strided_slice %1 {offsets = [0, 0, 2], sizes = [4, 24, 1], strides = [1, 1, 1]} : vector<4x24x3xf32> to vector<4x24x1xf32>
    %12 = arith.addf %10, %11 : vector<4x24x1xf32>
    %c0_5 = arith.constant 0 : index
    %c0_6 = arith.constant 0 : index
    %13 = vector.load %arg3[%c0_5, %c0_6] : memref<48x32xf32, #tpu.memory_space<vmem>>, vector<48x32xf32>
    %cst_7 = arith.constant dense<0.000000e+00> : vector<96x32xf32>
    %14 = tpu.matmul %8, %13, %cst_7 {dimension_numbers = #tpu.dot_dimension_numbers<[1], [0], [0], [1], [0, 0, 1, 1], [], []>} : vector<96x48xf32>, vector<48x32xf32>, vector<96x32xf32> -> vector<96x32xf32>
    %15 = vector.shape_cast %14 : vector<96x32xf32> to vector<4x24x32xf32>
    %c0_8 = arith.constant 0 : index
    %c0_9 = arith.constant 0 : index
    %16 = vector.load %arg4[%c0_8, %c0_9] : memref<1x32xf32, #tpu.memory_space<vmem>>, vector<1x32xf32>
    %17 = vector.shape_cast %16 : vector<1x32xf32> to vector<1x1x32xf32>
    %18 = vector.broadcast %17 : vector<1x1x32xf32> to vector<4x24x32xf32>
    %19 = arith.addf %15, %18 : vector<4x24x32xf32>
    %20 = vector.broadcast %9 : vector<4x24x1xf32> to vector<4x24x32xf32>
    %21 = arith.addf %19, %20 : vector<4x24x32xf32>
    %cst_10 = arith.constant dense<0xFF800000> : vector<4x32xf32>
    %22 = vector.multi_reduction <maximumf>, %21, %cst_10 [1] : vector<4x24x32xf32> to vector<4x32xf32>
    %cst_11 = arith.constant 1.000000e+02 : f32
    %23 = vector.broadcast %cst_11 : f32 to vector<4x32xf32>
    %24 = arith.subf %22, %23 : vector<4x32xf32>
    %25 = vector.broadcast %12 : vector<4x24x1xf32> to vector<4x24x32xf32>
    %26 = arith.addf %19, %25 : vector<4x24x32xf32>
    %cst_12 = arith.constant dense<0xFF800000> : vector<4x32xf32>
    %27 = vector.multi_reduction <maximumf>, %26, %cst_12 [1] : vector<4x24x32xf32> to vector<4x32xf32>
    %cst_13 = arith.constant 1.000000e+02 : f32
    %28 = vector.broadcast %cst_13 : f32 to vector<4x32xf32>
    %29 = arith.subf %27, %28 : vector<4x32xf32>
    %30 = tpu.concatenate %24, %29 in 1 : vector<4x32xf32>, vector<4x32xf32> -> vector<4x64xf32>
    %cst_14 = arith.constant 0.000000e+00 : f32
    %31 = vector.broadcast %cst_14 : f32 to vector<4x64xf32>
    %32 = arith.maximumf %30, %31 : vector<4x64xf32>
    %c0_15 = arith.constant 0 : index
    %c0_16 = arith.constant 0 : index
    %33 = vector.load %arg9[%c0_15, %c0_16] : memref<4x64xf32, #tpu.memory_space<vmem>>, vector<4x64xf32>
    tpu.vector_store %arg9[%c0_15, %c0_16], %32 {strides = array<i32>} : memref<4x64xf32, #tpu.memory_space<vmem>>, vector<4x64xf32>,
    %34 = arith.addf %9, %10 : vector<4x24x1xf32>
    %c0_17 = arith.constant 0 : index
    %c0_18 = arith.constant 0 : index
    %35 = vector.load %arg5[%c0_17, %c0_18] : memref<48x32xf32, #tpu.memory_space<vmem>>, vector<48x32xf32>
    %cst_19 = arith.constant dense<0.000000e+00> : vector<96x32xf32>
    %36 = tpu.matmul %8, %35, %cst_19 {dimension_numbers = #tpu.dot_dimension_numbers<[1], [0], [0], [1], [0, 0, 1, 1], [], []>} : vector<96x48xf32>, vector<48x32xf32>, vector<96x32xf32> -> vector<96x32xf32>
    %37 = vector.shape_cast %36 : vector<96x32xf32> to vector<4x24x32xf32>
    %c0_20 = arith.constant 0 : index
    %c0_21 = arith.constant 0 : index
    %38 = vector.load %arg6[%c0_20, %c0_21] : memref<1x32xf32, #tpu.memory_space<vmem>>, vector<1x32xf32>
    %39 = vector.shape_cast %38 : vector<1x32xf32> to vector<1x1x32xf32>
    %40 = vector.broadcast %39 : vector<1x1x32xf32> to vector<4x24x32xf32>
    %41 = arith.addf %37, %40 : vector<4x24x32xf32>
    %42 = vector.broadcast %34 : vector<4x24x1xf32> to vector<4x24x32xf32>
    %43 = arith.addf %41, %42 : vector<4x24x32xf32>
    %cst_22 = arith.constant dense<0xFF800000> : vector<4x32xf32>
    %44 = vector.multi_reduction <maximumf>, %43, %cst_22 [1] : vector<4x24x32xf32> to vector<4x32xf32>
    %cst_23 = arith.constant 1.000000e+02 : f32
    %45 = vector.broadcast %cst_23 : f32 to vector<4x32xf32>
    %46 = arith.subf %44, %45 : vector<4x32xf32>
    %47 = vector.broadcast %11 : vector<4x24x1xf32> to vector<4x24x32xf32>
    %48 = arith.addf %41, %47 : vector<4x24x32xf32>
    %cst_24 = arith.constant dense<0xFF800000> : vector<4x32xf32>
    %49 = vector.multi_reduction <maximumf>, %48, %cst_24 [1] : vector<4x24x32xf32> to vector<4x32xf32>
    %cst_25 = arith.constant 1.000000e+02 : f32
    %50 = vector.broadcast %cst_25 : f32 to vector<4x32xf32>
    %51 = arith.subf %49, %50 : vector<4x32xf32>
    %52 = tpu.concatenate %46, %51 in 1 : vector<4x32xf32>, vector<4x32xf32> -> vector<4x64xf32>
    %cst_26 = arith.constant 0.000000e+00 : f32
    %53 = vector.broadcast %cst_26 : f32 to vector<4x64xf32>
    %54 = arith.maximumf %52, %53 : vector<4x64xf32>
    %c0_27 = arith.constant 0 : index
    %c0_28 = arith.constant 0 : index
    %55 = vector.load %arg10[%c0_27, %c0_28] : memref<4x64xf32, #tpu.memory_space<vmem>>, vector<4x64xf32>
    tpu.vector_store %arg10[%c0_27, %c0_28], %54 {strides = array<i32>} : memref<4x64xf32, #tpu.memory_space<vmem>>, vector<4x64xf32>,
    %c0_29 = arith.constant 0 : index
    %c0_30 = arith.constant 0 : index
    %56 = vector.load %arg7[%c0_29, %c0_30] : memref<48x32xf32, #tpu.memory_space<vmem>>, vector<48x32xf32>
    %cst_31 = arith.constant dense<0.000000e+00> : vector<96x32xf32>
    %57 = tpu.matmul %8, %56, %cst_31 {dimension_numbers = #tpu.dot_dimension_numbers<[1], [0], [0], [1], [0, 0, 1, 1], [], []>} : vector<96x48xf32>, vector<48x32xf32>, vector<96x32xf32> -> vector<96x32xf32>
    %58 = vector.shape_cast %57 : vector<96x32xf32> to vector<4x24x32xf32>
    %c0_32 = arith.constant 0 : index
    %c0_33 = arith.constant 0 : index
    %59 = vector.load %arg8[%c0_32, %c0_33] : memref<1x32xf32, #tpu.memory_space<vmem>>, vector<1x32xf32>
    %60 = vector.shape_cast %59 : vector<1x32xf32> to vector<1x1x32xf32>
    %61 = vector.broadcast %60 : vector<1x1x32xf32> to vector<4x24x32xf32>
    %62 = arith.addf %58, %61 : vector<4x24x32xf32>
    %63 = vector.broadcast %9 : vector<4x24x1xf32> to vector<4x24x32xf32>
    %64 = arith.addf %62, %63 : vector<4x24x32xf32>
    %cst_34 = arith.constant dense<0xFF800000> : vector<4x32xf32>
    %65 = vector.multi_reduction <maximumf>, %64, %cst_34 [1] : vector<4x24x32xf32> to vector<4x32xf32>
    %cst_35 = arith.constant 1.000000e+02 : f32
    %66 = vector.broadcast %cst_35 : f32 to vector<4x32xf32>
    %67 = arith.subf %65, %66 : vector<4x32xf32>
    %68 = vector.broadcast %10 : vector<4x24x1xf32> to vector<4x24x32xf32>
    %69 = arith.addf %62, %68 : vector<4x24x32xf32>
    %cst_36 = arith.constant dense<0xFF800000> : vector<4x32xf32>
    %70 = vector.multi_reduction <maximumf>, %69, %cst_36 [1] : vector<4x24x32xf32> to vector<4x32xf32>
    %cst_37 = arith.constant 1.000000e+02 : f32
    %71 = vector.broadcast %cst_37 : f32 to vector<4x32xf32>
    %72 = arith.subf %70, %71 : vector<4x32xf32>
    %73 = vector.broadcast %11 : vector<4x24x1xf32> to vector<4x24x32xf32>
    %74 = arith.addf %62, %73 : vector<4x24x32xf32>
    %cst_38 = arith.constant dense<0xFF800000> : vector<4x32xf32>
    %75 = vector.multi_reduction <maximumf>, %74, %cst_38 [1] : vector<4x24x32xf32> to vector<4x32xf32>
    %cst_39 = arith.constant 1.000000e+02 : f32
    %76 = vector.broadcast %cst_39 : f32 to vector<4x32xf32>
    %77 = arith.subf %75, %76 : vector<4x32xf32>
    %78 = tpu.concatenate %67, %72, %77 in 1 : vector<4x32xf32>, vector<4x32xf32>, vector<4x32xf32> -> vector<4x96xf32>
    %cst_40 = arith.constant 0.000000e+00 : f32
    %79 = vector.broadcast %cst_40 : f32 to vector<4x96xf32>
    %80 = arith.maximumf %78, %79 : vector<4x96xf32>
    %c0_41 = arith.constant 0 : index
    %c0_42 = arith.constant 0 : index
    %81 = vector.load %arg11[%c0_41, %c0_42] : memref<4x96xf32, #tpu.memory_space<vmem>>, vector<4x96xf32>
    tpu.vector_store %arg11[%c0_41, %c0_42], %80 {strides = array<i32>} : memref<4x96xf32, #tpu.memory_space<vmem>>, vector<4x96xf32>,
    return
  }
  func.func @transform_0(%arg0: i32) -> (i32, i32, i32) {
    %c0_i32 = arith.constant 0 : i32
    %c0_i32_0 = arith.constant 0 : i32
    %c0_i32_1 = arith.constant 0 : i32
    return %arg0, %c0_i32, %c0_i32_0 : i32, i32, i32
  }
  func.func @transform_1(%arg0: i32) -> (i32, i32, i32) {
    %c0_i32 = arith.constant 0 : i32
    %c0_i32_0 = arith.constant 0 : i32
    %c0_i32_1 = arith.constant 0 : i32
    return %arg0, %c0_i32, %c0_i32_0 : i32, i32, i32
  }
  func.func @transform_2(%arg0: i32) -> (i32, i32) {
    %c0_i32 = arith.constant 0 : i32
    %c0_i32_0 = arith.constant 0 : i32
    %c0_i32_1 = arith.constant 0 : i32
    return %c0_i32, %c0_i32_0 : i32, i32
  }
  func.func @transform_3(%arg0: i32) -> (i32, i32) {
    %c0_i32 = arith.constant 0 : i32
    %c0_i32_0 = arith.constant 0 : i32
    %c0_i32_1 = arith.constant 0 : i32
    return %c0_i32, %c0_i32_0 : i32, i32
  }
  func.func @transform_4(%arg0: i32) -> (i32, i32) {
    %c0_i32 = arith.constant 0 : i32
    %c0_i32_0 = arith.constant 0 : i32
    %c0_i32_1 = arith.constant 0 : i32
    return %c0_i32, %c0_i32_0 : i32, i32
  }
  func.func @transform_5(%arg0: i32) -> (i32, i32) {
    %c0_i32 = arith.constant 0 : i32
    %c0_i32_0 = arith.constant 0 : i32
    %c0_i32_1 = arith.constant 0 : i32
    return %c0_i32, %c0_i32_0 : i32, i32
  }
  func.func @transform_6(%arg0: i32) -> (i32, i32) {
    %c0_i32 = arith.constant 0 : i32
    %c0_i32_0 = arith.constant 0 : i32
    %c0_i32_1 = arith.constant 0 : i32
    return %c0_i32, %c0_i32_0 : i32, i32
  }
  func.func @transform_7(%arg0: i32) -> (i32, i32) {
    %c0_i32 = arith.constant 0 : i32
    %c0_i32_0 = arith.constant 0 : i32
    %c0_i32_1 = arith.constant 0 : i32
    return %c0_i32, %c0_i32_0 : i32, i32
  }
  func.func @transform_8(%arg0: i32) -> (i32, i32) {
    %c0_i32 = arith.constant 0 : i32
    %c0_i32_0 = arith.constant 0 : i32
    return %arg0, %c0_i32 : i32, i32
  }
  func.func @transform_9(%arg0: i32) -> (i32, i32) {
    %c0_i32 = arith.constant 0 : i32
    %c0_i32_0 = arith.constant 0 : i32
    return %arg0, %c0_i32 : i32, i32
  }
  func.func @transform_10(%arg0: i32) -> (i32, i32) {
    %c0_i32 = arith.constant 0 : i32
    %c0_i32_0 = arith.constant 0 : i32
    return %arg0, %c0_i32 : i32, i32
  }
}

module attributes {stable_mosaic.version = 11 : i64} {
  func.func @_head_kernel(%arg0: i32, %arg1: memref<4x128xf32, #tpu.memory_space<vmem>>, %arg2: memref<4x96xf32, #tpu.memory_space<vmem>>, %arg3: memref<128x96xf32, #tpu.memory_space<vmem>>, %arg4: memref<1x96xf32, #tpu.memory_space<vmem>>, %arg5: memref<96x32xf32, #tpu.memory_space<vmem>>, %arg6: memref<1x32xf32, #tpu.memory_space<vmem>>, %arg7: memref<96x32xf32, #tpu.memory_space<vmem>>, %arg8: memref<1x32xf32, #tpu.memory_space<vmem>>, %arg9: memref<4x32xf32, #tpu.memory_space<vmem>>, %arg10: memref<4x32xf32, #tpu.memory_space<vmem>>) attributes {dimension_semantics = [#tpu.dimension_semantics<parallel>], iteration_bounds = array<i64: 1>, scalar_prefetch = 0 : i64, scratch_operands = 0 : i64, tpu.core_type = #tpu.core_type<tc>, window_params = [{transform_indices = @transform_0, window_bounds = array<i64: 4, 128>}, {transform_indices = @transform_1, window_bounds = array<i64: 4, 96>}, {pipeline_mode = #tpu.pipeline_mode<synchronous>, transform_indices = @transform_2, window_bounds = array<i64: 128, 96>}, {pipeline_mode = #tpu.pipeline_mode<synchronous>, transform_indices = @transform_3, window_bounds = array<i64: 1, 96>}, {pipeline_mode = #tpu.pipeline_mode<synchronous>, transform_indices = @transform_4, window_bounds = array<i64: 96, 32>}, {pipeline_mode = #tpu.pipeline_mode<synchronous>, transform_indices = @transform_5, window_bounds = array<i64: 1, 32>}, {pipeline_mode = #tpu.pipeline_mode<synchronous>, transform_indices = @transform_6, window_bounds = array<i64: 96, 32>}, {pipeline_mode = #tpu.pipeline_mode<synchronous>, transform_indices = @transform_7, window_bounds = array<i64: 1, 32>}, {transform_indices = @transform_8, window_bounds = array<i64: 4, 32>}, {transform_indices = @transform_9, window_bounds = array<i64: 4, 32>}]} {
    %c0 = arith.constant 0 : index
    %c0_0 = arith.constant 0 : index
    %0 = vector.load %arg1[%c0, %c0_0] : memref<4x128xf32, #tpu.memory_space<vmem>>, vector<4x128xf32>
    %c0_1 = arith.constant 0 : index
    %c0_2 = arith.constant 0 : index
    %1 = vector.load %arg3[%c0_1, %c0_2] : memref<128x96xf32, #tpu.memory_space<vmem>>, vector<128x96xf32>
    %cst = arith.constant dense<0.000000e+00> : vector<4x96xf32>
    %2 = tpu.matmul %0, %1, %cst {dimension_numbers = #tpu.dot_dimension_numbers<[1], [0], [0], [1], [0, 0, 1, 1], [], []>} : vector<4x128xf32>, vector<128x96xf32>, vector<4x96xf32> -> vector<4x96xf32>
    %c0_3 = arith.constant 0 : index
    %c0_4 = arith.constant 0 : index
    %3 = vector.load %arg4[%c0_3, %c0_4] : memref<1x96xf32, #tpu.memory_space<vmem>>, vector<1x96xf32>
    %4 = vector.broadcast %3 : vector<1x96xf32> to vector<4x96xf32>
    %5 = arith.addf %2, %4 : vector<4x96xf32>
    %cst_5 = arith.constant 0.000000e+00 : f32
    %6 = vector.broadcast %cst_5 : f32 to vector<4x96xf32>
    %7 = arith.maximumf %5, %6 : vector<4x96xf32>
    %c0_6 = arith.constant 0 : index
    %c0_7 = arith.constant 0 : index
    %8 = vector.load %arg5[%c0_6, %c0_7] : memref<96x32xf32, #tpu.memory_space<vmem>>, vector<96x32xf32>
    %cst_8 = arith.constant dense<0.000000e+00> : vector<4x32xf32>
    %9 = tpu.matmul %7, %8, %cst_8 {dimension_numbers = #tpu.dot_dimension_numbers<[1], [0], [0], [1], [0, 0, 1, 1], [], []>} : vector<4x96xf32>, vector<96x32xf32>, vector<4x32xf32> -> vector<4x32xf32>
    %c0_9 = arith.constant 0 : index
    %c0_10 = arith.constant 0 : index
    %10 = vector.load %arg6[%c0_9, %c0_10] : memref<1x32xf32, #tpu.memory_space<vmem>>, vector<1x32xf32>
    %11 = vector.broadcast %10 : vector<1x32xf32> to vector<4x32xf32>
    %12 = arith.addf %9, %11 : vector<4x32xf32>
    %cst_11 = arith.constant 0.000000e+00 : f32
    %13 = vector.broadcast %cst_11 : f32 to vector<4x32xf32>
    %14 = arith.maximumf %12, %13 : vector<4x32xf32>
    %c0_12 = arith.constant 0 : index
    %c0_13 = arith.constant 0 : index
    %15 = vector.load %arg9[%c0_12, %c0_13] : memref<4x32xf32, #tpu.memory_space<vmem>>, vector<4x32xf32>
    tpu.vector_store %arg9[%c0_12, %c0_13], %14 {strides = array<i32>} : memref<4x32xf32, #tpu.memory_space<vmem>>, vector<4x32xf32>,
    %c0_14 = arith.constant 0 : index
    %c0_15 = arith.constant 0 : index
    %16 = vector.load %arg2[%c0_14, %c0_15] : memref<4x96xf32, #tpu.memory_space<vmem>>, vector<4x96xf32>
    %c0_16 = arith.constant 0 : index
    %c0_17 = arith.constant 0 : index
    %17 = vector.load %arg7[%c0_16, %c0_17] : memref<96x32xf32, #tpu.memory_space<vmem>>, vector<96x32xf32>
    %cst_18 = arith.constant dense<0.000000e+00> : vector<4x32xf32>
    %18 = tpu.matmul %16, %17, %cst_18 {dimension_numbers = #tpu.dot_dimension_numbers<[1], [0], [0], [1], [0, 0, 1, 1], [], []>} : vector<4x96xf32>, vector<96x32xf32>, vector<4x32xf32> -> vector<4x32xf32>
    %c0_19 = arith.constant 0 : index
    %c0_20 = arith.constant 0 : index
    %19 = vector.load %arg8[%c0_19, %c0_20] : memref<1x32xf32, #tpu.memory_space<vmem>>, vector<1x32xf32>
    %20 = vector.broadcast %19 : vector<1x32xf32> to vector<4x32xf32>
    %21 = arith.addf %18, %20 : vector<4x32xf32>
    %cst_21 = arith.constant 0.000000e+00 : f32
    %22 = vector.broadcast %cst_21 : f32 to vector<4x32xf32>
    %23 = arith.maximumf %21, %22 : vector<4x32xf32>
    %c0_22 = arith.constant 0 : index
    %c0_23 = arith.constant 0 : index
    %24 = vector.load %arg10[%c0_22, %c0_23] : memref<4x32xf32, #tpu.memory_space<vmem>>, vector<4x32xf32>
    tpu.vector_store %arg10[%c0_22, %c0_23], %23 {strides = array<i32>} : memref<4x32xf32, #tpu.memory_space<vmem>>, vector<4x32xf32>,
    return
  }
  func.func @transform_0(%arg0: i32) -> (i32, i32) {
    %c0_i32 = arith.constant 0 : i32
    %c0_i32_0 = arith.constant 0 : i32
    return %arg0, %c0_i32 : i32, i32
  }
  func.func @transform_1(%arg0: i32) -> (i32, i32) {
    %c0_i32 = arith.constant 0 : i32
    %c0_i32_0 = arith.constant 0 : i32
    return %arg0, %c0_i32 : i32, i32
  }
  func.func @transform_2(%arg0: i32) -> (i32, i32) {
    %c0_i32 = arith.constant 0 : i32
    %c0_i32_0 = arith.constant 0 : i32
    %c0_i32_1 = arith.constant 0 : i32
    return %c0_i32, %c0_i32_0 : i32, i32
  }
  func.func @transform_3(%arg0: i32) -> (i32, i32) {
    %c0_i32 = arith.constant 0 : i32
    %c0_i32_0 = arith.constant 0 : i32
    %c0_i32_1 = arith.constant 0 : i32
    return %c0_i32, %c0_i32_0 : i32, i32
  }
  func.func @transform_4(%arg0: i32) -> (i32, i32) {
    %c0_i32 = arith.constant 0 : i32
    %c0_i32_0 = arith.constant 0 : i32
    %c0_i32_1 = arith.constant 0 : i32
    return %c0_i32, %c0_i32_0 : i32, i32
  }
  func.func @transform_5(%arg0: i32) -> (i32, i32) {
    %c0_i32 = arith.constant 0 : i32
    %c0_i32_0 = arith.constant 0 : i32
    %c0_i32_1 = arith.constant 0 : i32
    return %c0_i32, %c0_i32_0 : i32, i32
  }
  func.func @transform_6(%arg0: i32) -> (i32, i32) {
    %c0_i32 = arith.constant 0 : i32
    %c0_i32_0 = arith.constant 0 : i32
    %c0_i32_1 = arith.constant 0 : i32
    return %c0_i32, %c0_i32_0 : i32, i32
  }
  func.func @transform_7(%arg0: i32) -> (i32, i32) {
    %c0_i32 = arith.constant 0 : i32
    %c0_i32_0 = arith.constant 0 : i32
    %c0_i32_1 = arith.constant 0 : i32
    return %c0_i32, %c0_i32_0 : i32, i32
  }
  func.func @transform_8(%arg0: i32) -> (i32, i32) {
    %c0_i32 = arith.constant 0 : i32
    %c0_i32_0 = arith.constant 0 : i32
    return %arg0, %c0_i32 : i32, i32
  }
  func.func @transform_9(%arg0: i32) -> (i32, i32) {
    %c0_i32 = arith.constant 0 : i32
    %c0_i32_0 = arith.constant 0 : i32
    return %arg0, %c0_i32 : i32, i32
  }
}

</mosaic_0001>

<llo_original>
// kernel: semantic_embedding_forward.3
$region0: #{semantic_embedding_forward.3}
  #allocation0 [shape = 'u32[]', space=smem, size = 0x4, offset = 0x4, fixed_abs, tag = 'smem constant byte address 0x4 - core index']
  #allocation1 [shape = 'u32[144,128]{1,0:T(1,128)}', space=vmem, size = 0x12000, scoped, tag = 'internal scratch']
  %s0 = inlined_call_operand.hbm [shape: f32[4,128], index: 0, kind: input, shape index: {}]
  %s1 = inlined_call_operand.hbm [shape: f32[4,96], index: 1, kind: input, shape index: {}]
  %s2 = inlined_call_operand.hbm [shape: f32[128,96], index: 2, kind: input, shape index: {}]
  %s3 = inlined_call_operand.hbm [shape: f32[1,96], index: 3, kind: input, shape index: {}]
  %s4 = inlined_call_operand.hbm [shape: f32[96,32], index: 4, kind: input, shape index: {}]
  %s5 = inlined_call_operand.hbm [shape: f32[1,32], index: 5, kind: input, shape index: {}]
  %s6 = inlined_call_operand.hbm [shape: f32[96,32], index: 6, kind: input, shape index: {}]
  %s7 = inlined_call_operand.hbm [shape: f32[1,32], index: 7, kind: input, shape index: {}]
  %s8 = inlined_call_operand.hbm [shape: f32[4,32], index: 8, kind: output, shape index: {0}]
  %s9 = inlined_call_operand.hbm [shape: f32[4,32], index: 9, kind: output, shape index: {1}]
  %10 = xla_tuple %s8, %s9
  %s11 = sld [smem:[#allocation0]]
  $region82: #{semantic_embedding_forward.3} parent=0
    _
  %s13 = ssub.s32 1, %s11
  %s14 = scalar_select 0, %s13, %s11
  $region1: #{semantic_embedding_forward.3} parent=0
    #allocation2 [shape = 'u8[2048]{0}', space=vmem, size = 0x800, scoped, tag = 'input window, operand 0, single buffered']
    #allocation3 [shape = 's32[1]{0}', space=sflag, size = 0x4, scoped, tag = 'scoped memory for semantic_embedding_forward.3']
    #allocation4 [shape = 's32[1]{0}', space=sflag, size = 0x4, scoped, tag = 'scoped memory for semantic_embedding_forward.3']
    #allocation5 [shape = 'u8[2048]{0}', space=vmem, size = 0x800, scoped, tag = 'input window, operand 1, single buffered']
    #allocation6 [shape = 's32[1]{0}', space=sflag, size = 0x4, scoped, tag = 'scoped memory for semantic_embedding_forward.3']
    #allocation7 [shape = 'u8[65536]{0}', space=vmem, size = 0x10000, scoped, tag = 'input window, operand 2, single buffered']
    #allocation8 [shape = 'u8[512]{0}', space=vmem, size = 0x400, scoped, tag = 'input window, operand 3, single buffered']
    #allocation9 [shape = 's32[1]{0}', space=sflag, size = 0x4, scoped, tag = 'scoped memory for semantic_embedding_forward.3']
    #allocation10 [shape = 'u8[49152]{0}', space=vmem, size = 0xc000, scoped, tag = 'input window, operand 4, single buffered']
    #allocation11 [shape = 'u8[512]{0}', space=vmem, size = 0x400, scoped, tag = 'input window, operand 5, single buffered']
    #allocation12 [shape = 's32[1]{0}', space=sflag, size = 0x4, scoped, tag = 'scoped memory for semantic_embedding_forward.3']
    #allocation13 [shape = 'u8[49152]{0}', space=vmem, size = 0xc000, scoped, tag = 'input window, operand 6, single buffered']
    #allocation14 [shape = 'u8[512]{0}', space=vmem, size = 0x400, scoped, tag = 'input window, operand 7, single buffered']
    #allocation15 [shape = 's32[1]{0}', space=sflag, size = 0x4, scoped, tag = 'scoped memory for semantic_embedding_forward.3']
    #allocation16 [shape = 'u8[2048]{0}', space=vmem, size = 0x800, scoped, tag = 'output window, operand 0, single buffered']
    #allocation17 [shape = 'u8[2048]{0}', space=vmem, size = 0x800, scoped, tag = 'output window, operand 1, single buffered']
    #allocation18 [shape = 's32[1]{0}', space=sflag, size = 0x4, scoped, tag = 'scoped memory for semantic_embedding_forward.3']
    %15 = vsyncpa [#allocation3], 0
    %16 = vsyncpa [#allocation6], 0
    %17 = vsyncpa [#allocation9], 0
    %18 = vsyncpa [#allocation12], 0
    %19 = vsyncpa [#allocation15], 0
    %20 = vsyncpa [#allocation4], 0
    %21 = vsyncpa [#allocation18], 0
    // Predicated region
    $region2: #{semantic_embedding_forward.3} parent=1 // pred_check
      _
    $region3: #{semantic_embedding_forward.3} parent=1 // pred_check_branch
      %23 = sbr.rel (0) target = $region5
    $region4: #{semantic_embedding_forward.3} parent=1 // pred_region
      %s25 = ssub.s32 64, 64
      %26 = vsyncadd [#allocation3], %s25
      %s28 = sshll.u32 [#allocation2], 4
      %s29 = int_to_ptr.vmem [resolvable:$true] %s28
      %31 = dma.hbm_to_vmem [thread:$0]  %s0, 64, %s29, [#allocation3]
    $region5: #{semantic_embedding_forward.3} parent=1 // pred_fallthru
      _
    // Predicated region
    $region6: #{semantic_embedding_forward.3} parent=1 // pred_check
      _
    $region7: #{semantic_embedding_forward.3} parent=1 // pred_check_branch
      %33 = sbr.rel (0) target = $region9
    $region8: #{semantic_embedding_forward.3} parent=1 // pred_region
      %s35 = ssub.s32 64, 64
      %36 = vsyncadd [#allocation6], %s35
      %s38 = sshll.u32 [#allocation5], 4
      %s39 = int_to_ptr.vmem [resolvable:$true] %s38
      %41 = dma.hbm_to_vmem [thread:$0]  %s1, 64, %s39, [#allocation6]
    $region9: #{semantic_embedding_forward.3} parent=1 // pred_fallthru
      _
    // Predicated region
    $region10: #{semantic_embedding_forward.3} parent=1 // pred_check
      _
    $region11: #{semantic_embedding_forward.3} parent=1 // pred_check_branch
      %43 = sbr.rel (0) target = $region13
    $region12: #{semantic_embedding_forward.3} parent=1 // pred_region
      %s45 = ssub.s32 2048, 2048
      %46 = vsyncadd [#allocation6], %s45
      %s47 = sshll.u32 [#allocation7], 4
      %s48 = int_to_ptr.vmem [resolvable:$true] %s47
      %53 = dma.hbm_to_vmem [thread:$0]  %s2, 2048, %s48, [#allocation6], 128, 128, 8
    $region13: #{semantic_embedding_forward.3} parent=1 // pred_fallthru
      _
    // Predicated region
    $region14: #{semantic_embedding_forward.3} parent=1 // pred_check
      _
    $region15: #{semantic_embedding_forward.3} parent=1 // pred_check_branch
      %55 = sbr.rel (0) target = $region17
    $region16: #{semantic_embedding_forward.3} parent=1 // pred_region
      %s57 = ssub.s32 16, 16
      %58 = vsyncadd [#allocation9], %s57
      %s60 = sshll.u32 [#allocation8], 4
      %s61 = int_to_ptr.vmem [resolvable:$true] %s60
      %63 = dma.hbm_to_vmem [thread:$0]  %s3, 16, %s61, [#allocation9]
    $region17: #{semantic_embedding_forward.3} parent=1 // pred_fallthru
      _
    // Predicated region
    $region18: #{semantic_embedding_forward.3} parent=1 // pred_check
      _
    $region19: #{semantic_embedding_forward.3} parent=1 // pred_check_branch
      %65 = sbr.rel (0) target = $region21
    $region20: #{semantic_embedding_forward.3} parent=1 // pred_region
      %s67 = ssub.s32 1536, 1536
      %68 = vsyncadd [#allocation9], %s67
      %s69 = sshll.u32 [#allocation10], 4
      %s70 = int_to_ptr.vmem [resolvable:$true] %s69
      %75 = dma.hbm_to_vmem [thread:$0]  %s4, 1536, %s70, [#allocation9], 128, 128, 8
    $region21: #{semantic_embedding_forward.3} parent=1 // pred_fallthru
      _
    // Predicated region
    $region22: #{semantic_embedding_forward.3} parent=1 // pred_check
      _
    $region23: #{semantic_embedding_forward.3} parent=1 // pred_check_branch
      %77 = sbr.rel (0) target = $region25
    $region24: #{semantic_embedding_forward.3} parent=1 // pred_region
      %s79 = ssub.s32 16, 16
      %80 = vsyncadd [#allocation12], %s79
      %s82 = sshll.u32 [#allocation11], 4
      %s83 = int_to_ptr.vmem [resolvable:$true] %s82
      %85 = dma.hbm_to_vmem [thread:$0]  %s5, 16, %s83, [#allocation12]
    $region25: #{semantic_embedding_forward.3} parent=1 // pred_fallthru
      _
    // Predicated region
    $region26: #{semantic_embedding_forward.3} parent=1 // pred_check
      _
    $region27: #{semantic_embedding_forward.3} parent=1 // pred_check_branch
      %87 = sbr.rel (0) target = $region29
    $region28: #{semantic_embedding_forward.3} parent=1 // pred_region
      %s89 = ssub.s32 1536, 1536
      %90 = vsyncadd [#allocation12], %s89
      %s91 = sshll.u32 [#allocation13], 4
      %s92 = int_to_ptr.vmem [resolvable:$true] %s91
      %97 = dma.hbm_to_vmem [thread:$0]  %s6, 1536, %s92, [#allocation12], 128, 128, 8
    $region29: #{semantic_embedding_forward.3} parent=1 // pred_fallthru
      _
    // Predicated region
    $region30: #{semantic_embedding_forward.3} parent=1 // pred_check
      _
    $region31: #{semantic_embedding_forward.3} parent=1 // pred_check_branch
      %99 = sbr.rel (0) target = $region33
    $region32: #{semantic_embedding_forward.3} parent=1 // pred_region
      %s101 = ssub.s32 16, 16
      %102 = vsyncadd [#allocation15], %s101
      %s104 = sshll.u32 [#allocation14], 4
      %s105 = int_to_ptr.vmem [resolvable:$true] %s104
      %107 = dma.hbm_to_vmem [thread:$0]  %s7, 16, %s105, [#allocation15]
    $region33: #{semantic_embedding_forward.3} parent=1 // pred_fallthru
      _
    // Predicated region
    $region34: #{semantic_embedding_forward.3} parent=1 // pred_check
      _
    $region35: #{semantic_embedding_forward.3} parent=1 // pred_check_branch
      %109 = sbr.rel (0) target = $region37
    $region36: #{semantic_embedding_forward.3} parent=1 // pred_region
      %110 = dma.done [#allocation3], 64
    $region37: #{semantic_embedding_forward.3} parent=1 // pred_fallthru
      _
    // Predicated region
    $region38: #{semantic_embedding_forward.3} parent=1 // pred_check
      _
    $region39: #{semantic_embedding_forward.3} parent=1 // pred_check_branch
      %112 = sbr.rel (0) target = $region41
    $region40: #{semantic_embedding_forward.3} parent=1 // pred_region
      %113 = dma.done [#allocation6], 64
    $region41: #{semantic_embedding_forward.3} parent=1 // pred_fallthru
      _
    // Predicated region
    $region42: #{semantic_embedding_forward.3} parent=1 // pred_check
      _
    $region43: #{semantic_embedding_forward.3} parent=1 // pred_check_branch
      %115 = sbr.rel (0) target = $region45
    $region44: #{semantic_embedding_forward.3} parent=1 // pred_region
      %116 = dma.done [#allocation6], 2048
    $region45: #{semantic_embedding_forward.3} parent=1 // pred_fallthru
      _
    // Predicated region
    $region46: #{semantic_embedding_forward.3} parent=1 // pred_check
      _
    $region47: #{semantic_embedding_forward.3} parent=1 // pred_check_branch
      %118 = sbr.rel (0) target = $region49
    $region48: #{semantic_embedding_forward.3} parent=1 // pred_region
      %119 = dma.done [#allocation9], 16
    $region49: #{semantic_embedding_forward.3} parent=1 // pred_fallthru
      _
    // Predicated region
    $region50: #{semantic_embedding_forward.3} parent=1 // pred_check
      _
    $region51: #{semantic_embedding_forward.3} parent=1 // pred_check_branch
      %121 = sbr.rel (0) target = $region53
    $region52: #{semantic_embedding_forward.3} parent=1 // pred_region
      %122 = dma.done [#allocation9], 1536
    $region53: #{semantic_embedding_forward.3} parent=1 // pred_fallthru
      _
    // Predicated region
    $region54: #{semantic_embedding_forward.3} parent=1 // pred_check
      _
    $region55: #{semantic_embedding_forward.3} parent=1 // pred_check_branch
      %124 = sbr.rel (0) target = $region57
    $region56: #{semantic_embedding_forward.3} parent=1 // pred_region
      %125 = dma.done [#allocation12], 16
    $region57: #{semantic_embedding_forward.3} parent=1 // pred_fallthru
      _
    // Predicated region
    $region58: #{semantic_embedding_forward.3} parent=1 // pred_check
      _
    $region59: #{semantic_embedding_forward.3} parent=1 // pred_check_branch
      %127 = sbr.rel (0) target = $region61
    $region60: #{semantic_embedding_forward.3} parent=1 // pred_region
      %128 = dma.done [#allocation12], 1536
    $region61: #{semantic_embedding_forward.3} parent=1 // pred_fallthru
      _
    // Predicated region
    $region62: #{semantic_embedding_forward.3} parent=1 // pred_check
      _
    $region63: #{semantic_embedding_forward.3} parent=1 // pred_check_branch
      %130 = sbr.rel (0) target = $region65
    $region64: #{semantic_embedding_forward.3} parent=1 // pred_region
      %131 = dma.done [#allocation15], 16
    $region65: #{semantic_embedding_forward.3} parent=1 // pred_fallthru
      _
    %v132 = vld [vmem:[#allocation2] sm:$0xf]
    %v133 = vld [vmem:[#allocation7] sm:$0xff]
    %v134 = vld [vmem:[#allocation7 + $0x8] sm:$0xff]
    %v135 = vld [vmem:[#allocation7 + $0x10] sm:$0xff]
    %v136 = vld [vmem:[#allocation7 + $0x18] sm:$0xff]
    %v137 = vld [vmem:[#allocation7 + $0x20] sm:$0xff]
    %v138 = vld [vmem:[#allocation7 + $0x28] sm:$0xff]
    %v139 = vld [vmem:[#allocation7 + $0x30] sm:$0xff]
    %v140 = vld [vmem:[#allocation7 + $0x38] sm:$0xff]
    %v141 = vld [vmem:[#allocation7 + $0x40] sm:$0xff]
    %v142 = vld [vmem:[#allocation7 + $0x48] sm:$0xff]
    %v143 = vld [vmem:[#allocation7 + $0x50] sm:$0xff]
    %v144 = vld [vmem:[#allocation7 + $0x58] sm:$0xff]
    %v145 = vld [vmem:[#allocation7 + $0x60] sm:$0xff]
    %v146 = vld [vmem:[#allocation7 + $0x68] sm:$0xff]
    %v147 = vld [vmem:[#allocation7 + $0x70] sm:$0xff]
    %v148 = vld [vmem:[#allocation7 + $0x78] sm:$0xff]
    %v149 = vld [vmem:[#allocation8] sm:$0x1]
    %v151 = vlaneseq
    %v152 = vshrl.u32 %v151, 7
    %v153 = vsub.s32 0, %v152
    %v154 = vrot.slane %v149, %v153
    %156 = vmatprep.subr.mxu0 0.0
    %157 = vmatpush1.msra.mxu0 %v133
    %158 = vmatprep.subr.mxu0 0.0
    %159 = vmatpush1.msra.mxu0 %v134
    %160 = vmatprep.subr.mxu0 0.0
    %161 = vmatpush1.msra.mxu0 %v135
    %162 = vmatprep.subr.mxu0 0.0
    %163 = vmatpush1.msra.mxu0 %v136
    %164 = vmatprep.subr.mxu0 0.0
    %165 = vmatpush1.msra.mxu0 %v137
    %166 = vmatprep.subr.mxu0 0.0
    %167 = vmatpush1.msra.mxu0 %v138
    %168 = vmatprep.subr.mxu0 0.0
    %169 = vmatpush1.msra.mxu0 %v139
    %170 = vmatprep.subr.mxu0 0.0
    %171 = vmatpush1.msra.mxu0 %v140
    %172 = vmatprep.subr.mxu0 0.0
    %173 = vmatpush1.msra.mxu0 %v141
    %174 = vmatprep.subr.mxu0 0.0
    %175 = vmatpush1.msra.mxu0 %v142
    %176 = vmatprep.subr.mxu0 0.0
    %177 = vmatpush1.msra.mxu0 %v143
    %178 = vmatprep.subr.mxu0 0.0
    %179 = vmatpush1.msra.mxu0 %v144
    %180 = vmatprep.subr.mxu0 0.0
    %181 = vmatpush1.msra.mxu0 %v145
    %182 = vmatprep.subr.mxu0 0.0
    %183 = vmatpush1.msra.mxu0 %v146
    %184 = vmatprep.subr.mxu0 0.0
    %185 = vmatpush1.msra.mxu0 %v147
    %186 = vmatprep.subr.mxu0 0.0
    %187 = vmatpush1.msra.mxu0 %v148
    %188 = vmatprep.subr.mxu0 0.0
    %189 = vmatpush1.msra.mxu0 0.0
    %190 = vmatprep.subr.mxu0 0.0
    %191 = vmatpush1.msra.mxu0 0.0
    %192 = vmatprep.subr.mxu0 0.0
    %193 = vmatpush1.msra.mxu0 0.0
    %194 = vmatprep.subr.mxu0 0.0
    %195 = vmatpush1.msra.mxu0 0.0
    %196 = vmatprep.subr.mxu0 0.0
    %197 = vmatpush1.msra.mxu0 0.0
    %198 = vmatprep.subr.mxu0 0.0
    %199 = vmatpush1.msra.mxu0 0.0
    %200 = vmatprep.subr.mxu0 0.0
    %201 = vmatpush1.msra.mxu0 0.0
    %202 = vmatprep.subr.mxu0 0.0
    %203 = vmatpush1.msra.mxu0 0.0
    %204 = vmatprep.subr.mxu0 0.0
    %205 = vmatpush1.msra.mxu0 0.0
    %206 = vmatprep.subr.mxu0 0.0
    %207 = vmatpush1.msra.mxu0 0.0
    %208 = vmatprep.subr.mxu0 0.0
    %209 = vmatpush1.msra.mxu0 0.0
    %210 = vmatprep.subr.mxu0 0.0
    %211 = vmatpush1.msra.mxu0 0.0
    %212 = vmatprep.subr.mxu0 0.0
    %213 = vmatpush1.msra.mxu0 0.0
    %214 = vmatprep.subr.mxu0 0.0
    %215 = vmatpush1.msra.mxu0 0.0
    %216 = vmatprep.subr.mxu0 0.0
    %217 = vmatpush1.msra.mxu0 0.0
    %218 = vmatprep.subr.mxu0 0.0
    %219 = vmatpush1.msra.mxu0 0.0
    %220 = vmatprep.mubr.f32.mxu0 0.0
    %221 = vmatmul.mubr.f32.gmra.mrb[0].mxu0 %v132
    %v222 = vpop.f32.mrb[0].mxu0
    %v223 = vadd.f32 %v154, %v222
    %v224 = vpop.f32.mrb[0].mxu0
    %225 = vdwg.mxu0
    %v226 = vmax.f32 %v223, 0.0
    %v227 = vld [vmem:[#allocation10] sm:$0xff]
    %v228 = vld [vmem:[#allocation10 + $0x8] sm:$0xff]
    %v229 = vld [vmem:[#allocation10 + $0x10] sm:$0xff]
    %v230 = vld [vmem:[#allocation10 + $0x18] sm:$0xff]
    %v231 = vld [vmem:[#allocation10 + $0x20] sm:$0xff]
    %v232 = vld [vmem:[#allocation10 + $0x28] sm:$0xff]
    %v233 = vld [vmem:[#allocation10 + $0x30] sm:$0xff]
    %v234 = vld [vmem:[#allocation10 + $0x38] sm:$0xff]
    %v235 = vld [vmem:[#allocation10 + $0x40] sm:$0xff]
    %v236 = vld [vmem:[#allocation10 + $0x48] sm:$0xff]
    %v237 = vld [vmem:[#allocation10 + $0x50] sm:$0xff]
    %v238 = vld [vmem:[#allocation10 + $0x58] sm:$0xff]
    %v239 = vld [vmem:[#allocation11] sm:$0x1]
    %v241 = vlaneseq
    %v242 = vshrl.u32 %v241, 7
    %v243 = vsub.s32 0, %v242
    %v244 = vrot.slane %v239, %v243
    %vm246 = vcmask 785408
    %v248 = vsel %vm246, %v226, 0
    %250 = vmatprep.subr.mxu0 0.0
    %251 = vmatpush1.msra.mxu0 %v227
    %252 = vmatprep.subr.mxu0 0.0
    %253 = vmatpush1.msra.mxu0 %v228
    %254 = vmatprep.subr.mxu0 0.0
    %255 = vmatpush1.msra.mxu0 %v229
    %256 = vmatprep.subr.mxu0 0.0
    %257 = vmatpush1.msra.mxu0 %v230
    %258 = vmatprep.subr.mxu0 0.0
    %259 = vmatpush1.msra.mxu0 %v231
    %260 = vmatprep.subr.mxu0 0.0
    %261 = vmatpush1.msra.mxu0 %v232
    %262 = vmatprep.subr.mxu0 0.0
    %263 = vmatpush1.msra.mxu0 %v233
    %264 = vmatprep.subr.mxu0 0.0
    %265 = vmatpush1.msra.mxu0 %v234
    %266 = vmatprep.subr.mxu0 0.0
    %267 = vmatpush1.msra.mxu0 %v235
    %268 = vmatprep.subr.mxu0 0.0
    %269 = vmatpush1.msra.mxu0 %v236
    %270 = vmatprep.subr.mxu0 0.0
    %271 = vmatpush1.msra.mxu0 %v237
    %272 = vmatprep.subr.mxu0 0.0
    %273 = vmatpush1.msra.mxu0 %v238
    %274 = vmatprep.subr.mxu0 0.0
    %275 = vmatpush1.msra.mxu0 0.0
    %276 = vmatprep.subr.mxu0 0.0
    %277 = vmatpush1.msra.mxu0 0.0
    %278 = vmatprep.subr.mxu0 0.0
    %279 = vmatpush1.msra.mxu0 0.0
    %280 = vmatprep.subr.mxu0 0.0
    %281 = vmatpush1.msra.mxu0 0.0
    %282 = vmatprep.subr.mxu0 0.0
    %283 = vmatpush1.msra.mxu0 0.0
    %284 = vmatprep.subr.mxu0 0.0
    %285 = vmatpush1.msra.mxu0 0.0
    %286 = vmatprep.subr.mxu0 0.0
    %287 = vmatpush1.msra.mxu0 0.0
    %288 = vmatprep.subr.mxu0 0.0
    %289 = vmatpush1.msra.mxu0 0.0
    %290 = vmatprep.subr.mxu0 0.0
    %291 = vmatpush1.msra.mxu0 0.0
    %292 = vmatprep.subr.mxu0 0.0
    %293 = vmatpush1.msra.mxu0 0.0
    %294 = vmatprep.subr.mxu0 0.0
    %295 = vmatpush1.msra.mxu0 0.0
    %296 = vmatprep.subr.mxu0 0.0
    %297 = vmatpush1.msra.mxu0 0.0
    %298 = vmatprep.subr.mxu0 0.0
    %299 = vmatpush1.msra.mxu0 0.0
    %300 = vmatprep.subr.mxu0 0.0
    %301 = vmatpush1.msra.mxu0 0.0
    %302 = vmatprep.subr.mxu0 0.0
    %303 = vmatpush1.msra.mxu0 0.0
    %304 = vmatprep.subr.mxu0 0.0
    %305 = vmatpush1.msra.mxu0 0.0
    %306 = vmatprep.subr.mxu0 0.0
    %307 = vmatpush1.msra.mxu0 0.0
    %308 = vmatprep.subr.mxu0 0.0
    %309 = vmatpush1.msra.mxu0 0.0
    %310 = vmatprep.subr.mxu0 0.0
    %311 = vmatpush1.msra.mxu0 0.0
    %312 = vmatprep.subr.mxu0 0.0
    %313 = vmatpush1.msra.mxu0 0.0
    %314 = vmatprep.mubr.f32.mxu0 0.0
    %315 = vmatmul.mubr.f32.gmra.mrb[0].mxu0 %v248
    %v316 = vpop.f32.mrb[0].mxu0
    %v317 = vadd.f32 %v244, %v316
    %v318 = vpop.f32.mrb[0].mxu0
    %319 = vdwg.mxu0
    %v320 = vmax.f32 %v317, 0.0
    %vm321 = vcmask 257024
    %322 = vst.msk [vmem:[#allocation16] sm:$0xf] %vm321, %v320
    %v323 = vld [vmem:[#allocation5] sm:$0xf]
    %v324 = vld [vmem:[#allocation13] sm:$0xff]
    %v325 = vld [vmem:[#allocation13 + $0x8] sm:$0xff]
    %v326 = vld [vmem:[#allocation13 + $0x10] sm:$0xff]
    %v327 = vld [vmem:[#allocation13 + $0x18] sm:$0xff]
    %v328 = vld [vmem:[#allocation13 + $0x20] sm:$0xff]
    %v329 = vld [vmem:[#allocation13 + $0x28] sm:$0xff]
    %v330 = vld [vmem:[#allocation13 + $0x30] sm:$0xff]
    %v331 = vld [vmem:[#allocation13 + $0x38] sm:$0xff]
    %v332 = vld [vmem:[#allocation13 + $0x40] sm:$0xff]
    %v333 = vld [vmem:[#allocation13 + $0x48] sm:$0xff]
    %v334 = vld [vmem:[#allocation13 + $0x50] sm:$0xff]
    %v335 = vld [vmem:[#allocation13 + $0x58] sm:$0xff]
    %v336 = vld [vmem:[#allocation14] sm:$0x1]
    %v338 = vlaneseq
    %v339 = vshrl.u32 %v338, 7
    %v340 = vsub.s32 0, %v339
    %v341 = vrot.slane %v336, %v340
    %v344 = vsel %vm246, %v323, 0
    %346 = vmatprep.subr.mxu0 0.0
    %347 = vmatpush1.msra.mxu0 %v324
    %348 = vmatprep.subr.mxu0 0.0
    %349 = vmatpush1.msra.mxu0 %v325
    %350 = vmatprep.subr.mxu0 0.0
    %351 = vmatpush1.msra.mxu0 %v326
    %352 = vmatprep.subr.mxu0 0.0
    %353 = vmatpush1.msra.mxu0 %v327
    %354 = vmatprep.subr.mxu0 0.0
    %355 = vmatpush1.msra.mxu0 %v328
    %356 = vmatprep.subr.mxu0 0.0
    %357 = vmatpush1.msra.mxu0 %v329
    %358 = vmatprep.subr.mxu0 0.0
    %359 = vmatpush1.msra.mxu0 %v330
    %360 = vmatprep.subr.mxu0 0.0
    %361 = vmatpush1.msra.mxu0 %v331
    %362 = vmatprep.subr.mxu0 0.0
    %363 = vmatpush1.msra.mxu0 %v332
    %364 = vmatprep.subr.mxu0 0.0
    %365 = vmatpush1.msra.mxu0 %v333
    %366 = vmatprep.subr.mxu0 0.0
    %367 = vmatpush1.msra.mxu0 %v334
    %368 = vmatprep.subr.mxu0 0.0
    %369 = vmatpush1.msra.mxu0 %v335
    %370 = vmatprep.subr.mxu0 0.0
    %371 = vmatpush1.msra.mxu0 0.0
    %372 = vmatprep.subr.mxu0 0.0
    %373 = vmatpush1.msra.mxu0 0.0
    %374 = vmatprep.subr.mxu0 0.0
    %375 = vmatpush1.msra.mxu0 0.0
    %376 = vmatprep.subr.mxu0 0.0
    %377 = vmatpush1.msra.mxu0 0.0
    %378 = vmatprep.subr.mxu0 0.0
    %379 = vmatpush1.msra.mxu0 0.0
    %380 = vmatprep.subr.mxu0 0.0
    %381 = vmatpush1.msra.mxu0 0.0
    %382 = vmatprep.subr.mxu0 0.0
    %383 = vmatpush1.msra.mxu0 0.0
    %384 = vmatprep.subr.mxu0 0.0
    %385 = vmatpush1.msra.mxu0 0.0
    %386 = vmatprep.subr.mxu0 0.0
    %387 = vmatpush1.msra.mxu0 0.0
    %388 = vmatprep.subr.mxu0 0.0
    %389 = vmatpush1.msra.mxu0 0.0
    %390 = vmatprep.subr.mxu0 0.0
    %391 = vmatpush1.msra.mxu0 0.0
    %392 = vmatprep.subr.mxu0 0.0
    %393 = vmatpush1.msra.mxu0 0.0
    %394 = vmatprep.subr.mxu0 0.0
    %395 = vmatpush1.msra.mxu0 0.0
    %396 = vmatprep.subr.mxu0 0.0
    %397 = vmatpush1.msra.mxu0 0.0
    %398 = vmatprep.subr.mxu0 0.0
    %399 = vmatpush1.msra.mxu0 0.0
    %400 = vmatprep.subr.mxu0 0.0
    %401 = vmatpush1.msra.mxu0 0.0
    %402 = vmatprep.subr.mxu0 0.0
    %403 = vmatpush1.msra.mxu0 0.0
    %404 = vmatprep.subr.mxu0 0.0
    %405 = vmatpush1.msra.mxu0 0.0
    %406 = vmatprep.subr.mxu0 0.0
    %407 = vmatpush1.msra.mxu0 0.0
    %408 = vmatprep.subr.mxu0 0.0
    %409 = vmatpush1.msra.mxu0 0.0
    %410 = vmatprep.mubr.f32.mxu0 0.0
    %411 = vmatmul.mubr.f32.gmra.mrb[0].mxu0 %v344
    %v412 = vpop.f32.mrb[0].mxu0
    %v413 = vadd.f32 %v341, %v412
    %v414 = vpop.f32.mrb[0].mxu0
    %415 = vdwg.mxu0
    %v416 = vmax.f32 %v413, 0.0
    %417 = vst.msk [vmem:[#allocation17] sm:$0xf] %vm321, %v416
    // Predicated region
    $region66: #{semantic_embedding_forward.3} parent=1 // pred_check
      _
    $region67: #{semantic_embedding_forward.3} parent=1 // pred_check_branch
      %419 = sbr.rel (0) target = $region69
    $region68: #{semantic_embedding_forward.3} parent=1 // pred_region
      %s421 = ssub.s32 64, 64
      %422 = vsyncadd [#allocation4], %s421
      %s424 = sshll.u32 [#allocation16], 4
      %s425 = int_to_ptr.vmem [resolvable:$true] %s424
      %427 = dma.vmem_to_hbm [thread:$0]  %s425, 64, %s8, [#allocation4]
    $region69: #{semantic_embedding_forward.3} parent=1 // pred_fallthru
      _
    // Predicated region
    $region70: #{semantic_embedding_forward.3} parent=1 // pred_check
      _
    $region71: #{semantic_embedding_forward.3} parent=1 // pred_check_branch
      %429 = sbr.rel (0) target = $region73
    $region72: #{semantic_embedding_forward.3} parent=1 // pred_region
      %s431 = ssub.s32 64, 64
      %432 = vsyncadd [#allocation18], %s431
      %s434 = sshll.u32 [#allocation17], 4
      %s435 = int_to_ptr.vmem [resolvable:$true] %s434
      %437 = dma.vmem_to_hbm [thread:$0]  %s435, 64, %s9, [#allocation18]
    $region73: #{semantic_embedding_forward.3} parent=1 // pred_fallthru
      _
    // Predicated region
    $region74: #{semantic_embedding_forward.3} parent=1 // pred_check
      _
    $region75: #{semantic_embedding_forward.3} parent=1 // pred_check_branch
      %439 = sbr.rel (0) target = $region77
    $region76: #{semantic_embedding_forward.3} parent=1 // pred_region
      %440 = dma.done [#allocation4], 64
    $region77: #{semantic_embedding_forward.3} parent=1 // pred_fallthru
      _
    // Predicated region
    $region78: #{semantic_embedding_forward.3} parent=1 // pred_check
      _
    $region79: #{semantic_embedding_forward.3} parent=1 // pred_check_branch
      %442 = sbr.rel (0) target = $region81
    $region80: #{semantic_embedding_forward.3} parent=1 // pred_region
      %443 = dma.done [#allocation18], 64
    $region81: #{semantic_embedding_forward.3} parent=1 // pred_fallthru
      _
    %444 = vsyncpa [#allocation3], 1
    %445 = vsyncpa [#allocation6], 1
    %446 = vsyncpa [#allocation9], 1
    %447 = vsyncpa [#allocation12], 1
    %448 = vsyncpa [#allocation15], 1
    %449 = vsyncpa [#allocation4], 1
    %450 = vsyncpa [#allocation18], 1

// kernel: semantic_embedding_forward.2
$region0: #{semantic_embedding_forward.2}
  #allocation0 [shape = 'u32[]', space=smem, size = 0x4, offset = 0x4, fixed_abs, tag = 'smem constant byte address 0x4 - core index']
  #allocation1 [shape = 'u32[144,128]{1,0:T(1,128)}', space=vmem, size = 0x12000, scoped, tag = 'internal scratch']
  %s0 = inlined_call_operand.hbm [shape: f32[4,24,16], index: 0, kind: input, shape index: {}]
  %s1 = inlined_call_operand.hbm [shape: f32[4,24,3], index: 1, kind: input, shape index: {}]
  %s2 = inlined_call_operand.hbm [shape: f32[48,32], index: 2, kind: input, shape index: {}]
  %s3 = inlined_call_operand.hbm [shape: f32[1,32], index: 3, kind: input, shape index: {}]
  %s4 = inlined_call_operand.hbm [shape: f32[48,32], index: 4, kind: input, shape index: {}]
  %s5 = inlined_call_operand.hbm [shape: f32[1,32], index: 5, kind: input, shape index: {}]
  %s6 = inlined_call_operand.hbm [shape: f32[48,32], index: 6, kind: input, shape index: {}]
  %s7 = inlined_call_operand.hbm [shape: f32[1,32], index: 7, kind: input, shape index: {}]
  %s8 = inlined_call_operand.hbm [shape: f32[4,64], index: 8, kind: output, shape index: {0}]
  %s9 = inlined_call_operand.hbm [shape: f32[4,64], index: 9, kind: output, shape index: {1}]
  %s10 = inlined_call_operand.hbm [shape: f32[4,96], index: 10, kind: output, shape index: {2}]
  %11 = xla_tuple %s8, %s9, %s10
  %s12 = sld [smem:[#allocation0]]
  $region90: #{semantic_embedding_forward.2} parent=0
    _
  %s14 = ssub.s32 1, %s12
  %s15 = scalar_select 0, %s14, %s12
  $region1: #{semantic_embedding_forward.2} parent=0
    #allocation2 [shape = 'u8[49152]{0}', space=vmem, size = 0xc000, scoped, tag = 'input window, operand 0, single buffered']
    #allocation3 [shape = 's32[1]{0}', space=sflag, size = 0x4, scoped, tag = 'scoped memory for semantic_embedding_forward.2']
    #allocation4 [shape = 's32[1]{0}', space=sflag, size = 0x4, scoped, tag = 'scoped memory for semantic_embedding_forward.2']
    #allocation5 [shape = 'u8[49152]{0}', space=vmem, size = 0xc000, scoped, tag = 'input window, operand 1, single buffered']
    #allocation6 [shape = 's32[1]{0}', space=sflag, size = 0x4, scoped, tag = 'scoped memory for semantic_embedding_forward.2']
    #allocation7 [shape = 'u8[24576]{0}', space=vmem, size = 0x6000, scoped, tag = 'input window, operand 2, single buffered']
    #allocation8 [shape = 'u8[512]{0}', space=vmem, size = 0x400, scoped, tag = 'input window, operand 3, single buffered']
    #allocation9 [shape = 's32[1]{0}', space=sflag, size = 0x4, scoped, tag = 'scoped memory for semantic_embedding_forward.2']
    #allocation10 [shape = 'u8[24576]{0}', space=vmem, size = 0x6000, scoped, tag = 'input window, operand 4, single buffered']
    #allocation11 [shape = 'u8[512]{0}', space=vmem, size = 0x400, scoped, tag = 'input window, operand 5, single buffered']
    #allocation12 [shape = 's32[1]{0}', space=sflag, size = 0x4, scoped, tag = 'scoped memory for semantic_embedding_forward.2']
    #allocation13 [shape = 'u8[24576]{0}', space=vmem, size = 0x6000, scoped, tag = 'input window, operand 6, single buffered']
    #allocation14 [shape = 'u8[512]{0}', space=vmem, size = 0x400, scoped, tag = 'input window, operand 7, single buffered']
    #allocation15 [shape = 's32[1]{0}', space=sflag, size = 0x4, scoped, tag = 'scoped memory for semantic_embedding_forward.2']
    #allocation16 [shape = 'u8[2048]{0}', space=vmem, size = 0x800, scoped, tag = 'output window, operand 0, single buffered']
    #allocation17 [shape = 'u8[2048]{0}', space=vmem, size = 0x800, scoped, tag = 'output window, operand 1, single buffered']
    #allocation18 [shape = 's32[1]{0}', space=sflag, size = 0x4, scoped, tag = 'scoped memory for semantic_embedding_forward.2']
    #allocation19 [shape = 'u8[2048]{0}', space=vmem, size = 0x800, scoped, tag = 'output window, operand 2, single buffered']
    %16 = vsyncpa [#allocation3], 0
    %17 = vsyncpa [#allocation6], 0
    %18 = vsyncpa [#allocation9], 0
    %19 = vsyncpa [#allocation12], 0
    %20 = vsyncpa [#allocation15], 0
    %21 = vsyncpa [#allocation4], 0
    %22 = vsyncpa [#allocation18], 0
    // Predicated region
    $region2: #{semantic_embedding_forward.2} parent=1 // pred_check
      _
    $region3: #{semantic_embedding_forward.2} parent=1 // pred_check_branch
      %24 = sbr.rel (0) target = $region5
    $region4: #{semantic_embedding_forward.2} parent=1 // pred_region
      %s26 = ssub.s32 1536, 1536
      %27 = vsyncadd [#allocation3], %s26
      %s28 = sshll.u32 [#allocation2], 4
      %s29 = int_to_ptr.vmem [resolvable:$true] %s28
      %34 = dma.hbm_to_vmem [thread:$0]  %s0, 1536, %s29, [#allocation3], 128, 128, 8
    $region5: #{semantic_embedding_forward.2} parent=1 // pred_fallthru
      _
    // Predicated region
    $region6: #{semantic_embedding_forward.2} parent=1 // pred_check
      _
    $region7: #{semantic_embedding_forward.2} parent=1 // pred_check_branch
      %36 = sbr.rel (0) target = $region9
    $region8: #{semantic_embedding_forward.2} parent=1 // pred_region
      %s38 = ssub.s32 1536, 1536
      %39 = vsyncadd [#allocation6], %s38
      %s40 = sshll.u32 [#allocation5], 4
      %s41 = int_to_ptr.vmem [resolvable:$true] %s40
      %46 = dma.hbm_to_vmem [thread:$0]  %s1, 1536, %s41, [#allocation6], 128, 128, 8
    $region9: #{semantic_embedding_forward.2} parent=1 // pred_fallthru
      _
    // Predicated region
    $region10: #{semantic_embedding_forward.2} parent=1 // pred_check
      _
    $region11: #{semantic_embedding_forward.2} parent=1 // pred_check_branch
      %48 = sbr.rel (0) target = $region13
    $region12: #{semantic_embedding_forward.2} parent=1 // pred_region
      %s50 = ssub.s32 768, 768
      %51 = vsyncadd [#allocation6], %s50
      %s52 = sshll.u32 [#allocation7], 4
      %s53 = int_to_ptr.vmem [resolvable:$true] %s52
      %58 = dma.hbm_to_vmem [thread:$0]  %s2, 768, %s53, [#allocation6], 128, 128, 8
    $region13: #{semantic_embedding_forward.2} parent=1 // pred_fallthru
      _
    // Predicated region
    $region14: #{semantic_embedding_forward.2} parent=1 // pred_check
      _
    $region15: #{semantic_embedding_forward.2} parent=1 // pred_check_branch
      %60 = sbr.rel (0) target = $region17
    $region16: #{semantic_embedding_forward.2} parent=1 // pred_region
      %s62 = ssub.s32 16, 16
      %63 = vsyncadd [#allocation9], %s62
      %s65 = sshll.u32 [#allocation8], 4
      %s66 = int_to_ptr.vmem [resolvable:$true] %s65
      %68 = dma.hbm_to_vmem [thread:$0]  %s3, 16, %s66, [#allocation9]
    $region17: #{semantic_embedding_forward.2} parent=1 // pred_fallthru
      _
    // Predicated region
    $region18: #{semantic_embedding_forward.2} parent=1 // pred_check
      _
    $region19: #{semantic_embedding_forward.2} parent=1 // pred_check_branch
      %70 = sbr.rel (0) target = $region21
    $region20: #{semantic_embedding_forward.2} parent=1 // pred_region
      %s72 = ssub.s32 768, 768
      %73 = vsyncadd [#allocation9], %s72
      %s74 = sshll.u32 [#allocation10], 4
      %s75 = int_to_ptr.vmem [resolvable:$true] %s74
      %80 = dma.hbm_to_vmem [thread:$0]  %s4, 768, %s75, [#allocation9], 128, 128, 8
    $region21: #{semantic_embedding_forward.2} parent=1 // pred_fallthru
      _
    // Predicated region
    $region22: #{semantic_embedding_forward.2} parent=1 // pred_check
      _
    $region23: #{semantic_embedding_forward.2} parent=1 // pred_check_branch
      %82 = sbr.rel (0) target = $region25
    $region24: #{semantic_embedding_forward.2} parent=1 // pred_region
      %s84 = ssub.s32 16, 16
      %85 = vsyncadd [#allocation12], %s84
      %s87 = sshll.u32 [#allocation11], 4
      %s88 = int_to_ptr.vmem [resolvable:$true] %s87
      %90 = dma.hbm_to_vmem [thread:$0]  %s5, 16, %s88, [#allocation12]
    $region25: #{semantic_embedding_forward.2} parent=1 // pred_fallthru
      _
    // Predicated region
    $region26: #{semantic_embedding_forward.2} parent=1 // pred_check
      _
    $region27: #{semantic_embedding_forward.2} parent=1 // pred_check_branch
      %92 = sbr.rel (0) target = $region29
    $region28: #{semantic_embedding_forward.2} parent=1 // pred_region
      %s94 = ssub.s32 768, 768
      %95 = vsyncadd [#allocation12], %s94
      %s96 = sshll.u32 [#allocation13], 4
      %s97 = int_to_ptr.vmem [resolvable:$true] %s96
      %102 = dma.hbm_to_vmem [thread:$0]  %s6, 768, %s97, [#allocation12], 128, 128, 8
    $region29: #{semantic_embedding_forward.2} parent=1 // pred_fallthru
      _
    // Predicated region
    $region30: #{semantic_embedding_forward.2} parent=1 // pred_check
      _
    $region31: #{semantic_embedding_forward.2} parent=1 // pred_check_branch
      %104 = sbr.rel (0) target = $region33
    $region32: #{semantic_embedding_forward.2} parent=1 // pred_region
      %s106 = ssub.s32 16, 16
      %107 = vsyncadd [#allocation15], %s106
      %s109 = sshll.u32 [#allocation14], 4
      %s110 = int_to_ptr.vmem [resolvable:$true] %s109
      %112 = dma.hbm_to_vmem [thread:$0]  %s7, 16, %s110, [#allocation15]
    $region33: #{semantic_embedding_forward.2} parent=1 // pred_fallthru
      _
    // Predicated region
    $region34: #{semantic_embedding_forward.2} parent=1 // pred_check
      _
    $region35: #{semantic_embedding_forward.2} parent=1 // pred_check_branch
      %114 = sbr.rel (0) target = $region37
    $region36: #{semantic_embedding_forward.2} parent=1 // pred_region
      %115 = dma.done [#allocation3], 1536
    $region37: #{semantic_embedding_forward.2} parent=1 // pred_fallthru
      _
    // Predicated region
    $region38: #{semantic_embedding_forward.2} parent=1 // pred_check
      _
    $region39: #{semantic_embedding_forward.2} parent=1 // pred_check_branch
      %117 = sbr.rel (0) target = $region41
    $region40: #{semantic_embedding_forward.2} parent=1 // pred_region
      %118 = dma.done [#allocation6], 1536
    $region41: #{semantic_embedding_forward.2} parent=1 // pred_fallthru
      _
    // Predicated region
    $region42: #{semantic_embedding_forward.2} parent=1 // pred_check
      _
    $region43: #{semantic_embedding_forward.2} parent=1 // pred_check_branch
      %120 = sbr.rel (0) target = $region45
    $region44: #{semantic_embedding_forward.2} parent=1 // pred_region
      %121 = dma.done [#allocation6], 768
    $region45: #{semantic_embedding_forward.2} parent=1 // pred_fallthru
      _
    // Predicated region
    $region46: #{semantic_embedding_forward.2} parent=1 // pred_check
      _
    $region47: #{semantic_embedding_forward.2} parent=1 // pred_check_branch
      %123 = sbr.rel (0) target = $region49
    $region48: #{semantic_embedding_forward.2} parent=1 // pred_region
      %124 = dma.done [#allocation9], 16
    $region49: #{semantic_embedding_forward.2} parent=1 // pred_fallthru
      _
    // Predicated region
    $region50: #{semantic_embedding_forward.2} parent=1 // pred_check
      _
    $region51: #{semantic_embedding_forward.2} parent=1 // pred_check_branch
      %126 = sbr.rel (0) target = $region53
    $region52: #{semantic_embedding_forward.2} parent=1 // pred_region
      %127 = dma.done [#allocation9], 768
    $region53: #{semantic_embedding_forward.2} parent=1 // pred_fallthru
      _
    // Predicated region
    $region54: #{semantic_embedding_forward.2} parent=1 // pred_check
      _
    $region55: #{semantic_embedding_forward.2} parent=1 // pred_check_branch
      %129 = sbr.rel (0) target = $region57
    $region56: #{semantic_embedding_forward.2} parent=1 // pred_region
      %130 = dma.done [#allocation12], 16
    $region57: #{semantic_embedding_forward.2} parent=1 // pred_fallthru
      _
    // Predicated region
    $region58: #{semantic_embedding_forward.2} parent=1 // pred_check
      _
    $region59: #{semantic_embedding_forward.2} parent=1 // pred_check_branch
      %132 = sbr.rel (0) target = $region61
    $region60: #{semantic_embedding_forward.2} parent=1 // pred_region
      %133 = dma.done [#allocation12], 768
    $region61: #{semantic_embedding_forward.2} parent=1 // pred_fallthru
      _
    // Predicated region
    $region62: #{semantic_embedding_forward.2} parent=1 // pred_check
      _
    $region63: #{semantic_embedding_forward.2} parent=1 // pred_check_branch
      %135 = sbr.rel (0) target = $region65
    $region64: #{semantic_embedding_forward.2} parent=1 // pred_region
      %136 = dma.done [#allocation15], 16
    $region65: #{semantic_embedding_forward.2} parent=1 // pred_fallthru
      _
    %v137 = vld [vmem:[#allocation2] sm:$0xff]
    %v138 = vld [vmem:[#allocation2 + $0x8] sm:$0xff]
    %v139 = vld [vmem:[#allocation2 + $0x10] sm:$0xff]
    %v140 = vld [vmem:[#allocation2 + $0x18] sm:$0xff]
    %v141 = vld [vmem:[#allocation2 + $0x20] sm:$0xff]
    %v142 = vld [vmem:[#allocation2 + $0x28] sm:$0xff]
    %v143 = vld [vmem:[#allocation2 + $0x30] sm:$0xff]
    %v144 = vld [vmem:[#allocation2 + $0x38] sm:$0xff]
    %v145 = vld [vmem:[#allocation2 + $0x40] sm:$0xff]
    %v146 = vld [vmem:[#allocation2 + $0x48] sm:$0xff]
    %v147 = vld [vmem:[#allocation2 + $0x50] sm:$0xff]
    %v148 = vld [vmem:[#allocation2 + $0x58] sm:$0xff]
    %v149 = vld [vmem:[#allocation5] sm:$0xff]
    %v150 = vld [vmem:[#allocation5 + $0x8] sm:$0xff]
    %v151 = vld [vmem:[#allocation5 + $0x10] sm:$0xff]
    %v152 = vld [vmem:[#allocation5 + $0x18] sm:$0xff]
    %v153 = vld [vmem:[#allocation5 + $0x20] sm:$0xff]
    %v154 = vld [vmem:[#allocation5 + $0x28] sm:$0xff]
    %v155 = vld [vmem:[#allocation5 + $0x30] sm:$0xff]
    %v156 = vld [vmem:[#allocation5 + $0x38] sm:$0xff]
    %v157 = vld [vmem:[#allocation5 + $0x40] sm:$0xff]
    %v158 = vld [vmem:[#allocation5 + $0x48] sm:$0xff]
    %v159 = vld [vmem:[#allocation5 + $0x50] sm:$0xff]
    %v160 = vld [vmem:[#allocation5 + $0x58] sm:$0xff]
    %vm173 = vcmask 1040384
    %v174 = vrot.slane %v137, 7
    %v175 = vrot.slane %v138, 7
    %v176 = vsel %vm173, %v174, %v175
    %v177 = vrot.slane %v139, 7
    %v178 = vsel %vm173, %v175, %v177
    %v179 = vrot.slane %v140, 7
    %v180 = vrot.slane %v141, 7
    %v181 = vsel %vm173, %v179, %v180
    %v182 = vrot.slane %v142, 7
    %v183 = vsel %vm173, %v180, %v182
    %v184 = vrot.slane %v143, 7
    %v185 = vrot.slane %v144, 7
    %v186 = vsel %vm173, %v184, %v185
    %v187 = vrot.slane %v145, 7
    %v188 = vsel %vm173, %v185, %v187
    %v189 = vrot.slane %v146, 7
    %v190 = vrot.slane %v147, 7
    %v191 = vsel %vm173, %v189, %v190
    %v192 = vrot.slane %v148, 7
    %v193 = vsel %vm173, %v190, %v192
    %v206 = vsel %vm173, 0.0, %v174
    %v207 = vsel %vm173, 0.0, %v179
    %v208 = vsel %vm173, 0.0, %v184
    %v209 = vsel %vm173, 0.0, %v189
    %vm210 = vcmask 1046528
    %v211 = vrot.slane %v137, 1
    %v212 = vrot.slane %v138, 1
    %v213 = vsel %vm210, %v211, %v212
    %v214 = vrot.slane %v139, 1
    %v215 = vsel %vm210, %v212, %v214
    %v216 = vrot.slane %v140, 1
    %v217 = vrot.slane %v141, 1
    %v218 = vsel %vm210, %v216, %v217
    %v219 = vrot.slane %v142, 1
    %v220 = vsel %vm210, %v217, %v219
    %v221 = vrot.slane %v143, 1
    %v222 = vrot.slane %v144, 1
    %v223 = vsel %vm210, %v221, %v222
    %v224 = vrot.slane %v145, 1
    %v225 = vsel %vm210, %v222, %v224
    %v226 = vrot.slane %v146, 1
    %v227 = vrot.slane %v147, 1
    %v228 = vsel %vm210, %v226, %v227
    %v229 = vrot.slane %v148, 1
    %v230 = vsel %vm210, %v227, %v229
    %v235 = vsel %vm210, %v214, 0.0
    %v236 = vsel %vm210, %v219, 0.0
    %v237 = vsel %vm210, %v224, 0.0
    %v238 = vsel %vm210, %v229, 0.0
    %239 = vrot.lane.b32.xlu0 %v137, 16
    %v240 = vpop.permute.xlu0 %239
    %241 = vrot.lane.b32.xlu0 %v138, 16
    %v242 = vpop.permute.xlu0 %241
    %243 = vrot.lane.b32.xlu0 %v139, 16
    %v244 = vpop.permute.xlu0 %243
    %245 = vrot.lane.b32.xlu0 %v140, 16
    %v246 = vpop.permute.xlu0 %245
    %247 = vrot.lane.b32.xlu0 %v141, 16
    %v248 = vpop.permute.xlu0 %247
    %249 = vrot.lane.b32.xlu0 %v142, 16
    %v250 = vpop.permute.xlu0 %249
    %251 = vrot.lane.b32.xlu0 %v143, 16
    %v252 = vpop.permute.xlu0 %251
    %253 = vrot.lane.b32.xlu0 %v144, 16
    %v254 = vpop.permute.xlu0 %253
    %255 = vrot.lane.b32.xlu0 %v145, 16
    %v256 = vpop.permute.xlu0 %255
    %257 = vrot.lane.b32.xlu0 %v146, 16
    %v258 = vpop.permute.xlu0 %257
    %259 = vrot.lane.b32.xlu0 %v147, 16
    %v260 = vpop.permute.xlu0 %259
    %261 = vrot.lane.b32.xlu0 %v148, 16
    %v262 = vpop.permute.xlu0 %261
    %279 = vrot.lane.b32.xlu0 %v213, 32
    %v280 = vpop.permute.xlu0 %279
    %281 = vrot.lane.b32.xlu0 %v215, 32
    %v282 = vpop.permute.xlu0 %281
    %283 = vrot.lane.b32.xlu0 %v235, 32
    %v284 = vpop.permute.xlu0 %283
    %285 = vrot.lane.b32.xlu0 %v218, 32
    %v286 = vpop.permute.xlu0 %285
    %287 = vrot.lane.b32.xlu0 %v220, 32
    %v288 = vpop.permute.xlu0 %287
    %289 = vrot.lane.b32.xlu0 %v236, 32
    %v290 = vpop.permute.xlu0 %289
    %291 = vrot.lane.b32.xlu0 %v223, 32
    %v292 = vpop.permute.xlu0 %291
    %293 = vrot.lane.b32.xlu0 %v225, 32
    %v294 = vpop.permute.xlu0 %293
    %295 = vrot.lane.b32.xlu0 %v237, 32
    %v296 = vpop.permute.xlu0 %295
    %297 = vrot.lane.b32.xlu0 %v228, 32
    %v298 = vpop.permute.xlu0 %297
    %299 = vrot.lane.b32.xlu0 %v230, 32
    %v300 = vpop.permute.xlu0 %299
    %301 = vrot.lane.b32.xlu0 %v238, 32
    %v302 = vpop.permute.xlu0 %301
    %vm315 = vcmask 130048
    %v316 = vsel %vm315, %v206, %v240
    %v317 = vsel %vm315, %v176, %v242
    %v318 = vsel %vm315, %v178, %v244
    %v319 = vsel %vm315, %v207, %v246
    %v320 = vsel %vm315, %v181, %v248
    %v321 = vsel %vm315, %v183, %v250
    %v322 = vsel %vm315, %v208, %v252
    %v323 = vsel %vm315, %v186, %v254
    %v324 = vsel %vm315, %v188, %v256
    %v325 = vsel %vm315, %v209, %v258
    %v326 = vsel %vm315, %v191, %v260
    %v327 = vsel %vm315, %v193, %v262
    %vm328 = vcmask 261120
    %v329 = vsel %vm328, %v316, %v280
    %v330 = vsel %vm328, %v317, %v282
    %v331 = vsel %vm328, %v318, %v284
    %v332 = vsel %vm328, %v319, %v286
    %v333 = vsel %vm328, %v320, %v288
    %v334 = vsel %vm328, %v321, %v290
    %v335 = vsel %vm328, %v322, %v292
    %v336 = vsel %vm328, %v323, %v294
    %v337 = vsel %vm328, %v324, %v296
    %v338 = vsel %vm328, %v325, %v298
    %v339 = vsel %vm328, %v326, %v300
    %v340 = vsel %vm328, %v327, %v302
    %353 = vrot.lane.b32.xlu0 %v149, 127
    %v354 = vpop.permute.xlu0 %353
    %355 = vrot.lane.b32.xlu0 %v150, 127
    %v356 = vpop.permute.xlu0 %355
    %357 = vrot.lane.b32.xlu0 %v151, 127
    %v358 = vpop.permute.xlu0 %357
    %359 = vrot.lane.b32.xlu0 %v152, 127
    %v360 = vpop.permute.xlu0 %359
    %361 = vrot.lane.b32.xlu0 %v153, 127
    %v362 = vpop.permute.xlu0 %361
    %363 = vrot.lane.b32.xlu0 %v154, 127
    %v364 = vpop.permute.xlu0 %363
    %365 = vrot.lane.b32.xlu0 %v155, 127
    %v366 = vpop.permute.xlu0 %365
    %367 = vrot.lane.b32.xlu0 %v156, 127
    %v368 = vpop.permute.xlu0 %367
    %369 = vrot.lane.b32.xlu0 %v157, 127
    %v370 = vpop.permute.xlu0 %369
    %371 = vrot.lane.b32.xlu0 %v158, 127
    %v372 = vpop.permute.xlu0 %371
    %373 = vrot.lane.b32.xlu0 %v159, 127
    %v374 = vpop.permute.xlu0 %373
    %375 = vrot.lane.b32.xlu0 %v160, 127
    %v376 = vpop.permute.xlu0 %375
    %v389 = vadd.f32 %v149, %v354
    %v390 = vadd.f32 %v150, %v356
    %v391 = vadd.f32 %v151, %v358
    %v392 = vadd.f32 %v152, %v360
    %v393 = vadd.f32 %v153, %v362
    %v394 = vadd.f32 %v154, %v364
    %v395 = vadd.f32 %v155, %v366
    %v396 = vadd.f32 %v156, %v368
    %v397 = vadd.f32 %v157, %v370
    %v398 = vadd.f32 %v158, %v372
    %v399 = vadd.f32 %v159, %v374
    %v400 = vadd.f32 %v160, %v376
    %v401 = vld [vmem:[#allocation7] sm:$0xff]
    %v402 = vld [vmem:[#allocation7 + $0x8] sm:$0xff]
    %v403 = vld [vmem:[#allocation7 + $0x10] sm:$0xff]
    %v404 = vld [vmem:[#allocation7 + $0x18] sm:$0xff]
    %v405 = vld [vmem:[#allocation7 + $0x20] sm:$0xff]
    %v406 = vld [vmem:[#allocation7 + $0x28] sm:$0xff]
    %vm407 = vcmask 392192
    %v409 = vsel %vm407, %v329, 0
    %v412 = vsel %vm407, %v330, 0
    %v415 = vsel %vm407, %v331, 0
    %v418 = vsel %vm407, %v332, 0
    %v421 = vsel %vm407, %v333, 0
    %v424 = vsel %vm407, %v334, 0
    %v427 = vsel %vm407, %v335, 0
    %v430 = vsel %vm407, %v336, 0
    %v433 = vsel %vm407, %v337, 0
    %v436 = vsel %vm407, %v338, 0
    %v439 = vsel %vm407, %v339, 0
    %v442 = vsel %vm407, %v340, 0
    %444 = vmatprep.subr.mxu0 0.0
    %445 = vmatpush1.msra.mxu0 %v401
    %446 = vmatprep.subr.mxu0 0.0
    %447 = vmatpush1.msra.mxu0 %v402
    %448 = vmatprep.subr.mxu0 0.0
    %449 = vmatpush1.msra.mxu0 %v403
    %450 = vmatprep.subr.mxu0 0.0
    %451 = vmatpush1.msra.mxu0 %v404
    %452 = vmatprep.subr.mxu0 0.0
    %453 = vmatpush1.msra.mxu0 %v405
    %454 = vmatprep.subr.mxu0 0.0
    %455 = vmatpush1.msra.mxu0 %v406
    %456 = vmatprep.subr.mxu0 0.0
    %457 = vmatpush1.msra.mxu0 0.0
    %458 = vmatprep.subr.mxu0 0.0
    %459 = vmatpush1.msra.mxu0 0.0
    %460 = vmatprep.subr.mxu0 0.0
    %461 = vmatpush1.msra.mxu0 0.0
    %462 = vmatprep.subr.mxu0 0.0
    %463 = vmatpush1.msra.mxu0 0.0
    %464 = vmatprep.subr.mxu0 0.0
    %465 = vmatpush1.msra.mxu0 0.0
    %466 = vmatprep.subr.mxu0 0.0
    %467 = vmatpush1.msra.mxu0 0.0
    %468 = vmatprep.subr.mxu0 0.0
    %469 = vmatpush1.msra.mxu0 0.0
    %470 = vmatprep.subr.mxu0 0.0
    %471 = vmatpush1.msra.mxu0 0.0
    %472 = vmatprep.subr.mxu0 0.0
    %473 = vmatpush1.msra.mxu0 0.0
    %474 = vmatprep.subr.mxu0 0.0
    %475 = vmatpush1.msra.mxu0 0.0
    %476 = vmatprep.subr.mxu0 0.0
    %477 = vmatpush1.msra.mxu0 0.0
    %478 = vmatprep.subr.mxu0 0.0
    %479 = vmatpush1.msra.mxu0 0.0
    %480 = vmatprep.subr.mxu0 0.0
    %481 = vmatpush1.msra.mxu0 0.0
    %482 = vmatprep.subr.mxu0 0.0
    %483 = vmatpush1.msra.mxu0 0.0
    %484 = vmatprep.subr.mxu0 0.0
    %485 = vmatpush1.msra.mxu0 0.0
    %486 = vmatprep.subr.mxu0 0.0
    %487 = vmatpush1.msra.mxu0 0.0
    %488 = vmatprep.subr.mxu0 0.0
    %489 = vmatpush1.msra.mxu0 0.0
    %490 = vmatprep.subr.mxu0 0.0
    %491 = vmatpush1.msra.mxu0 0.0
    %492 = vmatprep.subr.mxu0 0.0
    %493 = vmatpush1.msra.mxu0 0.0
    %494 = vmatprep.subr.mxu0 0.0
    %495 = vmatpush1.msra.mxu0 0.0
    %496 = vmatprep.subr.mxu0 0.0
    %497 = vmatpush1.msra.mxu0 0.0
    %498 = vmatprep.subr.mxu0 0.0
    %499 = vmatpush1.msra.mxu0 0.0
    %500 = vmatprep.subr.mxu0 0.0
    %501 = vmatpush1.msra.mxu0 0.0
    %502 = vmatprep.subr.mxu0 0.0
    %503 = vmatpush1.msra.mxu0 0.0
    %504 = vmatprep.subr.mxu0 0.0
    %505 = vmatpush1.msra.mxu0 0.0
    %506 = vmatprep.subr.mxu0 0.0
    %507 = vmatpush1.msra.mxu0 0.0
    %508 = vmatprep.mubr.f32.mxu0 0.0
    %509 = vmatmul.mubr.f32.gmra.mrb[0].mxu0 %v409
    %v510 = vpop.f32.mrb[0].mxu0
    %v511 = vadd.f32 0.0, %v510
    %v512 = vpop.f32.mrb[0].mxu0
    %513 = vmatprep.mubr.f32.mxu0 0.0
    %514 = vmatmul.mubr.f32.gmra.mrb[0].mxu0 %v412
    %v515 = vpop.f32.mrb[0].mxu0
    %v516 = vadd.f32 0.0, %v515
    %v517 = vpop.f32.mrb[0].mxu0
    %518 = vmatprep.mubr.f32.mxu0 0.0
    %519 = vmatmul.mubr.f32.gmra.mrb[0].mxu0 %v415
    %v520 = vpop.f32.mrb[0].mxu0
    %v521 = vadd.f32 0.0, %v520
    %v522 = vpop.f32.mrb[0].mxu0
    %523 = vmatprep.mubr.f32.mxu0 0.0
    %524 = vmatmul.mubr.f32.gmra.mrb[0].mxu0 %v418
    %v525 = vpop.f32.mrb[0].mxu0
    %v526 = vadd.f32 0.0, %v525
    %v527 = vpop.f32.mrb[0].mxu0
    %528 = vmatprep.mubr.f32.mxu0 0.0
    %529 = vmatmul.mubr.f32.gmra.mrb[0].mxu0 %v421
    %v530 = vpop.f32.mrb[0].mxu0
    %v531 = vadd.f32 0.0, %v530
    %v532 = vpop.f32.mrb[0].mxu0
    %533 = vmatprep.mubr.f32.mxu0 0.0
    %534 = vmatmul.mubr.f32.gmra.mrb[0].mxu0 %v424
    %v535 = vpop.f32.mrb[0].mxu0
    %v536 = vadd.f32 0.0, %v535
    %v537 = vpop.f32.mrb[0].mxu0
    %538 = vmatprep.mubr.f32.mxu0 0.0
    %539 = vmatmul.mubr.f32.gmra.mrb[0].mxu0 %v427
    %v540 = vpop.f32.mrb[0].mxu0
    %v541 = vadd.f32 0.0, %v540
    %v542 = vpop.f32.mrb[0].mxu0
    %543 = vmatprep.mubr.f32.mxu0 0.0
    %544 = vmatmul.mubr.f32.gmra.mrb[0].mxu0 %v430
    %v545 = vpop.f32.mrb[0].mxu0
    %v546 = vadd.f32 0.0, %v545
    %v547 = vpop.f32.mrb[0].mxu0
    %548 = vmatprep.mubr.f32.mxu0 0.0
    %549 = vmatmul.mubr.f32.gmra.mrb[0].mxu0 %v433
    %v550 = vpop.f32.mrb[0].mxu0
    %v551 = vadd.f32 0.0, %v550
    %v552 = vpop.f32.mrb[0].mxu0
    %553 = vmatprep.mubr.f32.mxu0 0.0
    %554 = vmatmul.mubr.f32.gmra.mrb[0].mxu0 %v436
    %v555 = vpop.f32.mrb[0].mxu0
    %v556 = vadd.f32 0.0, %v555
    %v557 = vpop.f32.mrb[0].mxu0
    %558 = vmatprep.mubr.f32.mxu0 0.0
    %559 = vmatmul.mubr.f32.gmra.mrb[0].mxu0 %v439
    %v560 = vpop.f32.mrb[0].mxu0
    %v561 = vadd.f32 0.0, %v560
    %v562 = vpop.f32.mrb[0].mxu0
    %563 = vmatprep.mubr.f32.mxu0 0.0
    %564 = vmatmul.mubr.f32.gmra.mrb[0].mxu0 %v442
    %v565 = vpop.f32.mrb[0].mxu0
    %v566 = vadd.f32 0.0, %v565
    %v567 = vpop.f32.mrb[0].mxu0
    %568 = vdwg.mxu0
    %v569 = vld [vmem:[#allocation8] sm:$0x1]
    %v571 = vlaneseq
    %v572 = vshrl.u32 %v571, 7
    %v573 = vsub.s32 0, %v572
    %v574 = vrot.slane %v569, %v573
    %v576 = vadd.f32 %v511, %v574
    %v577 = vadd.f32 %v516, %v574
    %v578 = vadd.f32 %v521, %v574
    %v579 = vadd.f32 %v526, %v574
    %v580 = vadd.f32 %v531, %v574
    %v581 = vadd.f32 %v536, %v574
    %v582 = vadd.f32 %v541, %v574
    %v583 = vadd.f32 %v546, %v574
    %v584 = vadd.f32 %v551, %v574
    %v585 = vadd.f32 %v556, %v574
    %v586 = vadd.f32 %v561, %v574
    %v587 = vadd.f32 %v566, %v574
    %588 = vset.pattern.permute.xlu0 0
    %589 = vperm.xlu0 %588, %v149
    %v590 = vpop.permute.xlu0 %589
    %592 = vset.pattern.permute.xlu0 0
    %593 = vperm.xlu0 %592, %v150
    %v594 = vpop.permute.xlu0 %593
    %596 = vset.pattern.permute.xlu0 0
    %597 = vperm.xlu0 %596, %v151
    %v598 = vpop.permute.xlu0 %597
    %600 = vset.pattern.permute.xlu0 0
    %601 = vperm.xlu0 %600, %v152
    %v602 = vpop.permute.xlu0 %601
    %604 = vset.pattern.permute.xlu0 0
    %605 = vperm.xlu0 %604, %v153
    %v606 = vpop.permute.xlu0 %605
    %608 = vset.pattern.permute.xlu0 0
    %609 = vperm.xlu0 %608, %v154
    %v610 = vpop.permute.xlu0 %609
    %612 = vset.pattern.permute.xlu0 0
    %613 = vperm.xlu0 %612, %v155
    %v614 = vpop.permute.xlu0 %613
    %616 = vset.pattern.permute.xlu0 0
    %617 = vperm.xlu0 %616, %v156
    %v618 = vpop.permute.xlu0 %617
    %620 = vset.pattern.permute.xlu0 0
    %621 = vperm.xlu0 %620, %v157
    %v622 = vpop.permute.xlu0 %621
    %624 = vset.pattern.permute.xlu0 0
    %625 = vperm.xlu0 %624, %v158
    %v626 = vpop.permute.xlu0 %625
    %628 = vset.pattern.permute.xlu0 0
    %629 = vperm.xlu0 %628, %v159
    %v630 = vpop.permute.xlu0 %629
    %632 = vset.pattern.permute.xlu0 0
    %633 = vperm.xlu0 %632, %v160
    %v634 = vpop.permute.xlu0 %633
    %v636 = vadd.f32 %v576, %v590
    %v637 = vadd.f32 %v577, %v594
    %v638 = vadd.f32 %v578, %v598
    %v639 = vadd.f32 %v579, %v602
    %v640 = vadd.f32 %v580, %v606
    %v641 = vadd.f32 %v581, %v610
    %v642 = vadd.f32 %v582, %v614
    %v643 = vadd.f32 %v583, %v618
    %v644 = vadd.f32 %v584, %v622
    %v645 = vadd.f32 %v585, %v626
    %v646 = vadd.f32 %v586, %v630
    %v647 = vadd.f32 %v587, %v634
    %v648 = vsel %vm328, %v636, -inf
    %v649 = vsel %vm328, %v637, -inf
    %v650 = vmax.f32 %v648, %v649
    %v651 = vsel %vm328, %v638, -inf
    %v652 = vmax.f32 %v650, %v651
    %v653 = vrot.slane %v652, 4
    %v654 = vmax.f32 %v652, %v653
    %v655 = vrot.slane %v654, 2
    %v656 = vmax.f32 %v654, %v655
    %v657 = vrot.slane %v656, 1
    %v658 = vmax.f32 %v656, %v657
    %v659 = vsel %vm328, %v639, -inf
    %v660 = vsel %vm328, %v640, -inf
    %v661 = vmax.f32 %v659, %v660
    %v662 = vsel %vm328, %v641, -inf
    %v663 = vmax.f32 %v661, %v662
    %v664 = vrot.slane %v663, 4
    %v665 = vmax.f32 %v663, %v664
    %v666 = vrot.slane %v665, 2
    %v667 = vmax.f32 %v665, %v666
    %v668 = vrot.slane %v667, 1
    %v669 = vmax.f32 %v667, %v668
    %v670 = vsel %vm328, %v642, -inf
    %v671 = vsel %vm328, %v643, -inf
    %v672 = vmax.f32 %v670, %v671
    %v673 = vsel %vm328, %v644, -inf
    %v674 = vmax.f32 %v672, %v673
    %v675 = vrot.slane %v674, 4
    %v676 = vmax.f32 %v674, %v675
    %v677 = vrot.slane %v676, 2
    %v678 = vmax.f32 %v676, %v677
    %v679 = vrot.slane %v678, 1
    %v680 = vmax.f32 %v678, %v679
    %v681 = vsel %vm328, %v645, -inf
    %v682 = vsel %vm328, %v646, -inf
    %v683 = vmax.f32 %v681, %v682
    %v684 = vsel %vm328, %v647, -inf
    %v685 = vmax.f32 %v683, %v684
    %v686 = vrot.slane %v685, 4
    %v687 = vmax.f32 %v685, %v686
    %v688 = vrot.slane %v687, 2
    %v689 = vmax.f32 %v687, %v688
    %v690 = vrot.slane %v689, 1
    %v691 = vmax.f32 %v689, %v690
    %v692 = vsub.f32 %v658, 100.0
    %v693 = vsub.f32 %v669, 100.0
    %v694 = vsub.f32 %v680, 100.0
    %v695 = vsub.f32 %v691, 100.0
    %697 = vset.pattern.permute.xlu0 1
    %698 = vperm.xlu0 %697, %v389
    %v699 = vpop.permute.xlu0 %698
    %702 = vset.pattern.permute.xlu0 1
    %703 = vperm.xlu0 %702, %v390
    %v704 = vpop.permute.xlu0 %703
    %707 = vset.pattern.permute.xlu0 1
    %708 = vperm.xlu0 %707, %v391
    %v709 = vpop.permute.xlu0 %708
    %712 = vset.pattern.permute.xlu0 1
    %713 = vperm.xlu0 %712, %v392
    %v714 = vpop.permute.xlu0 %713
    %717 = vset.pattern.permute.xlu0 1
    %718 = vperm.xlu0 %717, %v393
    %v719 = vpop.permute.xlu0 %718
    %722 = vset.pattern.permute.xlu0 1
    %723 = vperm.xlu0 %722, %v394
    %v724 = vpop.permute.xlu0 %723
    %727 = vset.pattern.permute.xlu0 1
    %728 = vperm.xlu0 %727, %v395
    %v729 = vpop.permute.xlu0 %728
    %732 = vset.pattern.permute.xlu0 1
    %733 = vperm.xlu0 %732, %v396
    %v734 = vpop.permute.xlu0 %733
    %737 = vset.pattern.permute.xlu0 1
    %738 = vperm.xlu0 %737, %v397
    %v739 = vpop.permute.xlu0 %738
    %742 = vset.pattern.permute.xlu0 1
    %743 = vperm.xlu0 %742, %v398
    %v744 = vpop.permute.xlu0 %743
    %747 = vset.pattern.permute.xlu0 1
    %748 = vperm.xlu0 %747, %v399
    %v749 = vpop.permute.xlu0 %748
    %752 = vset.pattern.permute.xlu0 1
    %753 = vperm.xlu0 %752, %v400
    %v754 = vpop.permute.xlu0 %753
    %v756 = vadd.f32 %v576, %v699
    %v757 = vadd.f32 %v577, %v704
    %v758 = vadd.f32 %v578, %v709
    %v759 = vadd.f32 %v579, %v714
    %v760 = vadd.f32 %v580, %v719
    %v761 = vadd.f32 %v581, %v724
    %v762 = vadd.f32 %v582, %v729
    %v763 = vadd.f32 %v583, %v734
    %v764 = vadd.f32 %v584, %v739
    %v765 = vadd.f32 %v585, %v744
    %v766 = vadd.f32 %v586, %v749
    %v767 = vadd.f32 %v587, %v754
    %v768 = vsel %vm328, %v756, -inf
    %v769 = vsel %vm328, %v757, -inf
    %v770 = vmax.f32 %v768, %v769
    %v771 = vsel %vm328, %v758, -inf
    %v772 = vmax.f32 %v770, %v771
    %v773 = vrot.slane %v772, 4
    %v774 = vmax.f32 %v772, %v773
    %v775 = vrot.slane %v774, 2
    %v776 = vmax.f32 %v774, %v775
    %v777 = vrot.slane %v776, 1
    %v778 = vmax.f32 %v776, %v777
    %v779 = vsel %vm328, %v759, -inf
    %v780 = vsel %vm328, %v760, -inf
    %v781 = vmax.f32 %v779, %v780
    %v782 = vsel %vm328, %v761, -inf
    %v783 = vmax.f32 %v781, %v782
    %v784 = vrot.slane %v783, 4
    %v785 = vmax.f32 %v783, %v784
    %v786 = vrot.slane %v785, 2
    %v787 = vmax.f32 %v785, %v786
    %v788 = vrot.slane %v787, 1
    %v789 = vmax.f32 %v787, %v788
    %v790 = vsel %vm328, %v762, -inf
    %v791 = vsel %vm328, %v763, -inf
    %v792 = vmax.f32 %v790, %v791
    %v793 = vsel %vm328, %v764, -inf
    %v794 = vmax.f32 %v792, %v793
    %v795 = vrot.slane %v794, 4
    %v796 = vmax.f32 %v794, %v795
    %v797 = vrot.slane %v796, 2
    %v798 = vmax.f32 %v796, %v797
    %v799 = vrot.slane %v798, 1
    %v800 = vmax.f32 %v798, %v799
    %v801 = vsel %vm328, %v765, -inf
    %v802 = vsel %vm328, %v766, -inf
    %v803 = vmax.f32 %v801, %v802
    %v804 = vsel %vm328, %v767, -inf
    %v805 = vmax.f32 %v803, %v804
    %v806 = vrot.slane %v805, 4
    %v807 = vmax.f32 %v805, %v806
    %v808 = vrot.slane %v807, 2
    %v809 = vmax.f32 %v807, %v808
    %v810 = vrot.slane %v809, 1
    %v811 = vmax.f32 %v809, %v810
    %v812 = vsub.f32 %v778, 100.0
    %v813 = vsub.f32 %v789, 100.0
    %v814 = vsub.f32 %v800, 100.0
    %v815 = vsub.f32 %v811, 100.0
    %vm820 = vcmask 1041409
    %v821 = vsel %vm820, %v693, %v692
    %vm822 = vcmask 1042434
    %v823 = vsel %vm822, %v694, %v821
    %vm824 = vcmask 1043459
    %v825 = vsel %vm824, %v695, %v823
    %v831 = vsel %vm820, %v813, %v812
    %v832 = vsel %vm822, %v814, %v831
    %v833 = vsel %vm824, %v815, %v832
    %834 = vrot.lane.b32.xlu0 %v833, 32
    %v835 = vpop.permute.xlu0 %834
    %v837 = vsel %vm328, %v825, %v835
    %v838 = vmax.f32 %v837, 0.0
    %vm839 = vcmask 519168
    %840 = vst.msk [vmem:[#allocation16] sm:$0xf] %vm839, %v838
    %v841 = vld [vmem:[#allocation10] sm:$0xff]
    %v842 = vld [vmem:[#allocation10 + $0x8] sm:$0xff]
    %v843 = vld [vmem:[#allocation10 + $0x10] sm:$0xff]
    %v844 = vld [vmem:[#allocation10 + $0x18] sm:$0xff]
    %v845 = vld [vmem:[#allocation10 + $0x20] sm:$0xff]
    %v846 = vld [vmem:[#allocation10 + $0x28] sm:$0xff]
    %847 = vmatprep.subr.mxu0 0.0
    %848 = vmatpush1.msra.mxu0 %v841
    %849 = vmatprep.subr.mxu0 0.0
    %850 = vmatpush1.msra.mxu0 %v842
    %851 = vmatprep.subr.mxu0 0.0
    %852 = vmatpush1.msra.mxu0 %v843
    %853 = vmatprep.subr.mxu0 0.0
    %854 = vmatpush1.msra.mxu0 %v844
    %855 = vmatprep.subr.mxu0 0.0
    %856 = vmatpush1.msra.mxu0 %v845
    %857 = vmatprep.subr.mxu0 0.0
    %858 = vmatpush1.msra.mxu0 %v846
    %859 = vmatprep.subr.mxu0 0.0
    %860 = vmatpush1.msra.mxu0 0.0
    %861 = vmatprep.subr.mxu0 0.0
    %862 = vmatpush1.msra.mxu0 0.0
    %863 = vmatprep.subr.mxu0 0.0
    %864 = vmatpush1.msra.mxu0 0.0
    %865 = vmatprep.subr.mxu0 0.0
    %866 = vmatpush1.msra.mxu0 0.0
    %867 = vmatprep.subr.mxu0 0.0
    %868 = vmatpush1.msra.mxu0 0.0
    %869 = vmatprep.subr.mxu0 0.0
    %870 = vmatpush1.msra.mxu0 0.0
    %871 = vmatprep.subr.mxu0 0.0
    %872 = vmatpush1.msra.mxu0 0.0
    %873 = vmatprep.subr.mxu0 0.0
    %874 = vmatpush1.msra.mxu0 0.0
    %875 = vmatprep.subr.mxu0 0.0
    %876 = vmatpush1.msra.mxu0 0.0
    %877 = vmatprep.subr.mxu0 0.0
    %878 = vmatpush1.msra.mxu0 0.0
    %879 = vmatprep.subr.mxu0 0.0
    %880 = vmatpush1.msra.mxu0 0.0
    %881 = vmatprep.subr.mxu0 0.0
    %882 = vmatpush1.msra.mxu0 0.0
    %883 = vmatprep.subr.mxu0 0.0
    %884 = vmatpush1.msra.mxu0 0.0
    %885 = vmatprep.subr.mxu0 0.0
    %886 = vmatpush1.msra.mxu0 0.0
    %887 = vmatprep.subr.mxu0 0.0
    %888 = vmatpush1.msra.mxu0 0.0
    %889 = vmatprep.subr.mxu0 0.0
    %890 = vmatpush1.msra.mxu0 0.0
    %891 = vmatprep.subr.mxu0 0.0
    %892 = vmatpush1.msra.mxu0 0.0
    %893 = vmatprep.subr.mxu0 0.0
    %894 = vmatpush1.msra.mxu0 0.0
    %895 = vmatprep.subr.mxu0 0.0
    %896 = vmatpush1.msra.mxu0 0.0
    %897 = vmatprep.subr.mxu0 0.0
    %898 = vmatpush1.msra.mxu0 0.0
    %899 = vmatprep.subr.mxu0 0.0
    %900 = vmatpush1.msra.mxu0 0.0
    %901 = vmatprep.subr.mxu0 0.0
    %902 = vmatpush1.msra.mxu0 0.0
    %903 = vmatprep.subr.mxu0 0.0
    %904 = vmatpush1.msra.mxu0 0.0
    %905 = vmatprep.subr.mxu0 0.0
    %906 = vmatpush1.msra.mxu0 0.0
    %907 = vmatprep.subr.mxu0 0.0
    %908 = vmatpush1.msra.mxu0 0.0
    %909 = vmatprep.subr.mxu0 0.0
    %910 = vmatpush1.msra.mxu0 0.0
    %911 = vmatprep.mubr.f32.mxu0 0.0
    %912 = vmatmul.mubr.f32.gmra.mrb[0].mxu0 %v409
    %v913 = vpop.f32.mrb[0].mxu0
    %v914 = vadd.f32 0.0, %v913
    %v915 = vpop.f32.mrb[0].mxu0
    %916 = vmatprep.mubr.f32.mxu0 0.0
    %917 = vmatmul.mubr.f32.gmra.mrb[0].mxu0 %v412
    %v918 = vpop.f32.mrb[0].mxu0
    %v919 = vadd.f32 0.0, %v918
    %v920 = vpop.f32.mrb[0].mxu0
    %921 = vmatprep.mubr.f32.mxu0 0.0
    %922 = vmatmul.mubr.f32.gmra.mrb[0].mxu0 %v415
    %v923 = vpop.f32.mrb[0].mxu0
    %v924 = vadd.f32 0.0, %v923
    %v925 = vpop.f32.mrb[0].mxu0
    %926 = vmatprep.mubr.f32.mxu0 0.0
    %927 = vmatmul.mubr.f32.gmra.mrb[0].mxu0 %v418
    %v928 = vpop.f32.mrb[0].mxu0
    %v929 = vadd.f32 0.0, %v928
    %v930 = vpop.f32.mrb[0].mxu0
    %931 = vmatprep.mubr.f32.mxu0 0.0
    %932 = vmatmul.mubr.f32.gmra.mrb[0].mxu0 %v421
    %v933 = vpop.f32.mrb[0].mxu0
    %v934 = vadd.f32 0.0, %v933
    %v935 = vpop.f32.mrb[0].mxu0
    %936 = vmatprep.mubr.f32.mxu0 0.0
    %937 = vmatmul.mubr.f32.gmra.mrb[0].mxu0 %v424
    %v938 = vpop.f32.mrb[0].mxu0
    %v939 = vadd.f32 0.0, %v938
    %v940 = vpop.f32.mrb[0].mxu0
    %941 = vmatprep.mubr.f32.mxu0 0.0
    %942 = vmatmul.mubr.f32.gmra.mrb[0].mxu0 %v427
    %v943 = vpop.f32.mrb[0].mxu0
    %v944 = vadd.f32 0.0, %v943
    %v945 = vpop.f32.mrb[0].mxu0
    %946 = vmatprep.mubr.f32.mxu0 0.0
    %947 = vmatmul.mubr.f32.gmra.mrb[0].mxu0 %v430
    %v948 = vpop.f32.mrb[0].mxu0
    %v949 = vadd.f32 0.0, %v948
    %v950 = vpop.f32.mrb[0].mxu0
    %951 = vmatprep.mubr.f32.mxu0 0.0
    %952 = vmatmul.mubr.f32.gmra.mrb[0].mxu0 %v433
    %v953 = vpop.f32.mrb[0].mxu0
    %v954 = vadd.f32 0.0, %v953
    %v955 = vpop.f32.mrb[0].mxu0
    %956 = vmatprep.mubr.f32.mxu0 0.0
    %957 = vmatmul.mubr.f32.gmra.mrb[0].mxu0 %v436
    %v958 = vpop.f32.mrb[0].mxu0
    %v959 = vadd.f32 0.0, %v958
    %v960 = vpop.f32.mrb[0].mxu0
    %961 = vmatprep.mubr.f32.mxu0 0.0
    %962 = vmatmul.mubr.f32.gmra.mrb[0].mxu0 %v439
    %v963 = vpop.f32.mrb[0].mxu0
    %v964 = vadd.f32 0.0, %v963
    %v965 = vpop.f32.mrb[0].mxu0
    %966 = vmatprep.mubr.f32.mxu0 0.0
    %967 = vmatmul.mubr.f32.gmra.mrb[0].mxu0 %v442
    %v968 = vpop.f32.mrb[0].mxu0
    %v969 = vadd.f32 0.0, %v968
    %v970 = vpop.f32.mrb[0].mxu0
    %971 = vdwg.mxu0
    %v972 = vld [vmem:[#allocation11] sm:$0x1]
    %v974 = vlaneseq
    %v975 = vshrl.u32 %v974, 7
    %v976 = vsub.s32 0, %v975
    %v977 = vrot.slane %v972, %v976
    %v979 = vadd.f32 %v914, %v977
    %v980 = vadd.f32 %v919, %v977
    %v981 = vadd.f32 %v924, %v977
    %v982 = vadd.f32 %v929, %v977
    %v983 = vadd.f32 %v934, %v977
    %v984 = vadd.f32 %v939, %v977
    %v985 = vadd.f32 %v944, %v977
    %v986 = vadd.f32 %v949, %v977
    %v987 = vadd.f32 %v954, %v977
    %v988 = vadd.f32 %v959, %v977
    %v989 = vadd.f32 %v964, %v977
    %v990 = vadd.f32 %v969, %v977
    %991 = vset.pattern.permute.xlu0 0
    %992 = vperm.xlu0 %991, %v389
    %v993 = vpop.permute.xlu0 %992
    %995 = vset.pattern.permute.xlu0 0
    %996 = vperm.xlu0 %995, %v390
    %v997 = vpop.permute.xlu0 %996
    %999 = vset.pattern.permute.xlu0 0
    %1000 = vperm.xlu0 %999, %v391
    %v1001 = vpop.permute.xlu0 %1000
    %1003 = vset.pattern.permute.xlu0 0
    %1004 = vperm.xlu0 %1003, %v392
    %v1005 = vpop.permute.xlu0 %1004
    %1007 = vset.pattern.permute.xlu0 0
    %1008 = vperm.xlu0 %1007, %v393
    %v1009 = vpop.permute.xlu0 %1008
    %1011 = vset.pattern.permute.xlu0 0
    %1012 = vperm.xlu0 %1011, %v394
    %v1013 = vpop.permute.xlu0 %1012
    %1015 = vset.pattern.permute.xlu0 0
    %1016 = vperm.xlu0 %1015, %v395
    %v1017 = vpop.permute.xlu0 %1016
    %1019 = vset.pattern.permute.xlu0 0
    %1020 = vperm.xlu0 %1019, %v396
    %v1021 = vpop.permute.xlu0 %1020
    %1023 = vset.pattern.permute.xlu0 0
    %1024 = vperm.xlu0 %1023, %v397
    %v1025 = vpop.permute.xlu0 %1024
    %1027 = vset.pattern.permute.xlu0 0
    %1028 = vperm.xlu0 %1027, %v398
    %v1029 = vpop.permute.xlu0 %1028
    %1031 = vset.pattern.permute.xlu0 0
    %1032 = vperm.xlu0 %1031, %v399
    %v1033 = vpop.permute.xlu0 %1032
    %1035 = vset.pattern.permute.xlu0 0
    %1036 = vperm.xlu0 %1035, %v400
    %v1037 = vpop.permute.xlu0 %1036
    %v1039 = vadd.f32 %v979, %v993
    %v1040 = vadd.f32 %v980, %v997
    %v1041 = vadd.f32 %v981, %v1001
    %v1042 = vadd.f32 %v982, %v1005
    %v1043 = vadd.f32 %v983, %v1009
    %v1044 = vadd.f32 %v984, %v1013
    %v1045 = vadd.f32 %v985, %v1017
    %v1046 = vadd.f32 %v986, %v1021
    %v1047 = vadd.f32 %v987, %v1025
    %v1048 = vadd.f32 %v988, %v1029
    %v1049 = vadd.f32 %v989, %v1033
    %v1050 = vadd.f32 %v990, %v1037
    %v1051 = vsel %vm328, %v1039, -inf
    %v1052 = vsel %vm328, %v1040, -inf
    %v1053 = vmax.f32 %v1051, %v1052
    %v1054 = vsel %vm328, %v1041, -inf
    %v1055 = vmax.f32 %v1053, %v1054
    %v1056 = vrot.slane %v1055, 4
    %v1057 = vmax.f32 %v1055, %v1056
    %v1058 = vrot.slane %v1057, 2
    %v1059 = vmax.f32 %v1057, %v1058
    %v1060 = vrot.slane %v1059, 1
    %v1061 = vmax.f32 %v1059, %v1060
    %v1062 = vsel %vm328, %v1042, -inf
    %v1063 = vsel %vm328, %v1043, -inf
    %v1064 = vmax.f32 %v1062, %v1063
    %v1065 = vsel %vm328, %v1044, -inf
    %v1066 = vmax.f32 %v1064, %v1065
    %v1067 = vrot.slane %v1066, 4
    %v1068 = vmax.f32 %v1066, %v1067
    %v1069 = vrot.slane %v1068, 2
    %v1070 = vmax.f32 %v1068, %v1069
    %v1071 = vrot.slane %v1070, 1
    %v1072 = vmax.f32 %v1070, %v1071
    %v1073 = vsel %vm328, %v1045, -inf
    %v1074 = vsel %vm328, %v1046, -inf
    %v1075 = vmax.f32 %v1073, %v1074
    %v1076 = vsel %vm328, %v1047, -inf
    %v1077 = vmax.f32 %v1075, %v1076
    %v1078 = vrot.slane %v1077, 4
    %v1079 = vmax.f32 %v1077, %v1078
    %v1080 = vrot.slane %v1079, 2
    %v1081 = vmax.f32 %v1079, %v1080
    %v1082 = vrot.slane %v1081, 1
    %v1083 = vmax.f32 %v1081, %v1082
    %v1084 = vsel %vm328, %v1048, -inf
    %v1085 = vsel %vm328, %v1049, -inf
    %v1086 = vmax.f32 %v1084, %v1085
    %v1087 = vsel %vm328, %v1050, -inf
    %v1088 = vmax.f32 %v1086, %v1087
    %v1089 = vrot.slane %v1088, 4
    %v1090 = vmax.f32 %v1088, %v1089
    %v1091 = vrot.slane %v1090, 2
    %v1092 = vmax.f32 %v1090, %v1091
    %v1093 = vrot.slane %v1092, 1
    %v1094 = vmax.f32 %v1092, %v1093
    %v1095 = vsub.f32 %v1061, 100.0
    %v1096 = vsub.f32 %v1072, 100.0
    %v1097 = vsub.f32 %v1083, 100.0
    %v1098 = vsub.f32 %v1094, 100.0
    %1099 = vset.pattern.permute.xlu0 2
    %1100 = vperm.xlu0 %1099, %v149
    %v1101 = vpop.permute.xlu0 %1100
    %1103 = vset.pattern.permute.xlu0 2
    %1104 = vperm.xlu0 %1103, %v150
    %v1105 = vpop.permute.xlu0 %1104
    %1107 = vset.pattern.permute.xlu0 2
    %1108 = vperm.xlu0 %1107, %v151
    %v1109 = vpop.permute.xlu0 %1108
    %1111 = vset.pattern.permute.xlu0 2
    %1112 = vperm.xlu0 %1111, %v152
    %v1113 = vpop.permute.xlu0 %1112
    %1115 = vset.pattern.permute.xlu0 2
    %1116 = vperm.xlu0 %1115, %v153
    %v1117 = vpop.permute.xlu0 %1116
    %1119 = vset.pattern.permute.xlu0 2
    %1120 = vperm.xlu0 %1119, %v154
    %v1121 = vpop.permute.xlu0 %1120
    %1123 = vset.pattern.permute.xlu0 2
    %1124 = vperm.xlu0 %1123, %v155
    %v1125 = vpop.permute.xlu0 %1124
    %1127 = vset.pattern.permute.xlu0 2
    %1128 = vperm.xlu0 %1127, %v156
    %v1129 = vpop.permute.xlu0 %1128
    %1131 = vset.pattern.permute.xlu0 2
    %1132 = vperm.xlu0 %1131, %v157
    %v1133 = vpop.permute.xlu0 %1132
    %1135 = vset.pattern.permute.xlu0 2
    %1136 = vperm.xlu0 %1135, %v158
    %v1137 = vpop.permute.xlu0 %1136
    %1139 = vset.pattern.permute.xlu0 2
    %1140 = vperm.xlu0 %1139, %v159
    %v1141 = vpop.permute.xlu0 %1140
    %1143 = vset.pattern.permute.xlu0 2
    %1144 = vperm.xlu0 %1143, %v160
    %v1145 = vpop.permute.xlu0 %1144
    %v1147 = vadd.f32 %v979, %v1101
    %v1148 = vadd.f32 %v980, %v1105
    %v1149 = vadd.f32 %v981, %v1109
    %v1150 = vadd.f32 %v982, %v1113
    %v1151 = vadd.f32 %v983, %v1117
    %v1152 = vadd.f32 %v984, %v1121
    %v1153 = vadd.f32 %v985, %v1125
    %v1154 = vadd.f32 %v986, %v1129
    %v1155 = vadd.f32 %v987, %v1133
    %v1156 = vadd.f32 %v988, %v1137
    %v1157 = vadd.f32 %v989, %v1141
    %v1158 = vadd.f32 %v990, %v1145
    %v1159 = vsel %vm328, %v1147, -inf
    %v1160 = vsel %vm328, %v1148, -inf
    %v1161 = vmax.f32 %v1159, %v1160
    %v1162 = vsel %vm328, %v1149, -inf
    %v1163 = vmax.f32 %v1161, %v1162
    %v1164 = vrot.slane %v1163, 4
    %v1165 = vmax.f32 %v1163, %v1164
    %v1166 = vrot.slane %v1165, 2
    %v1167 = vmax.f32 %v1165, %v1166
    %v1168 = vrot.slane %v1167, 1
    %v1169 = vmax.f32 %v1167, %v1168
    %v1170 = vsel %vm328, %v1150, -inf
    %v1171 = vsel %vm328, %v1151, -inf
    %v1172 = vmax.f32 %v1170, %v1171
    %v1173 = vsel %vm328, %v1152, -inf
    %v1174 = vmax.f32 %v1172, %v1173
    %v1175 = vrot.slane %v1174, 4
    %v1176 = vmax.f32 %v1174, %v1175
    %v1177 = vrot.slane %v1176, 2
    %v1178 = vmax.f32 %v1176, %v1177
    %v1179 = vrot.slane %v1178, 1
    %v1180 = vmax.f32 %v1178, %v1179
    %v1181 = vsel %vm328, %v1153, -inf
    %v1182 = vsel %vm328, %v1154, -inf
    %v1183 = vmax.f32 %v1181, %v1182
    %v1184 = vsel %vm328, %v1155, -inf
    %v1185 = vmax.f32 %v1183, %v1184
    %v1186 = vrot.slane %v1185, 4
    %v1187 = vmax.f32 %v1185, %v1186
    %v1188 = vrot.slane %v1187, 2
    %v1189 = vmax.f32 %v1187, %v1188
    %v1190 = vrot.slane %v1189, 1
    %v1191 = vmax.f32 %v1189, %v1190
    %v1192 = vsel %vm328, %v1156, -inf
    %v1193 = vsel %vm328, %v1157, -inf
    %v1194 = vmax.f32 %v1192, %v1193
    %v1195 = vsel %vm328, %v1158, -inf
    %v1196 = vmax.f32 %v1194, %v1195
    %v1197 = vrot.slane %v1196, 4
    %v1198 = vmax.f32 %v1196, %v1197
    %v1199 = vrot.slane %v1198, 2
    %v1200 = vmax.f32 %v1198, %v1199
    %v1201 = vrot.slane %v1200, 1
    %v1202 = vmax.f32 %v1200, %v1201
    %v1203 = vsub.f32 %v1169, 100.0
    %v1204 = vsub.f32 %v1180, 100.0
    %v1205 = vsub.f32 %v1191, 100.0
    %v1206 = vsub.f32 %v1202, 100.0
    %v1211 = vsel %vm820, %v1096, %v1095
    %v1212 = vsel %vm822, %v1097, %v1211
    %v1213 = vsel %vm824, %v1098, %v1212
    %v1219 = vsel %vm820, %v1204, %v1203
    %v1220 = vsel %vm822, %v1205, %v1219
    %v1221 = vsel %vm824, %v1206, %v1220
    %1222 = vrot.lane.b32.xlu0 %v1221, 32
    %v1223 = vpop.permute.xlu0 %1222
    %v1225 = vsel %vm328, %v1213, %v1223
    %v1226 = vmax.f32 %v1225, 0.0
    %1227 = vst.msk [vmem:[#allocation17] sm:$0xf] %vm839, %v1226
    %v1228 = vld [vmem:[#allocation13] sm:$0xff]
    %v1229 = vld [vmem:[#allocation13 + $0x8] sm:$0xff]
    %v1230 = vld [vmem:[#allocation13 + $0x10] sm:$0xff]
    %v1231 = vld [vmem:[#allocation13 + $0x18] sm:$0xff]
    %v1232 = vld [vmem:[#allocation13 + $0x20] sm:$0xff]
    %v1233 = vld [vmem:[#allocation13 + $0x28] sm:$0xff]
    %1234 = vmatprep.subr.mxu0 0.0
    %1235 = vmatpush1.msra.mxu0 %v1228
    %1236 = vmatprep.subr.mxu0 0.0
    %1237 = vmatpush1.msra.mxu0 %v1229
    %1238 = vmatprep.subr.mxu0 0.0
    %1239 = vmatpush1.msra.mxu0 %v1230
    %1240 = vmatprep.subr.mxu0 0.0
    %1241 = vmatpush1.msra.mxu0 %v1231
    %1242 = vmatprep.subr.mxu0 0.0
    %1243 = vmatpush1.msra.mxu0 %v1232
    %1244 = vmatprep.subr.mxu0 0.0
    %1245 = vmatpush1.msra.mxu0 %v1233
    %1246 = vmatprep.subr.mxu0 0.0
    %1247 = vmatpush1.msra.mxu0 0.0
    %1248 = vmatprep.subr.mxu0 0.0
    %1249 = vmatpush1.msra.mxu0 0.0
    %1250 = vmatprep.subr.mxu0 0.0
    %1251 = vmatpush1.msra.mxu0 0.0
    %1252 = vmatprep.subr.mxu0 0.0
    %1253 = vmatpush1.msra.mxu0 0.0
    %1254 = vmatprep.subr.mxu0 0.0
    %1255 = vmatpush1.msra.mxu0 0.0
    %1256 = vmatprep.subr.mxu0 0.0
    %1257 = vmatpush1.msra.mxu0 0.0
    %1258 = vmatprep.subr.mxu0 0.0
    %1259 = vmatpush1.msra.mxu0 0.0
    %1260 = vmatprep.subr.mxu0 0.0
    %1261 = vmatpush1.msra.mxu0 0.0
    %1262 = vmatprep.subr.mxu0 0.0
    %1263 = vmatpush1.msra.mxu0 0.0
    %1264 = vmatprep.subr.mxu0 0.0
    %1265 = vmatpush1.msra.mxu0 0.0
    %1266 = vmatprep.subr.mxu0 0.0
    %1267 = vmatpush1.msra.mxu0 0.0
    %1268 = vmatprep.subr.mxu0 0.0
    %1269 = vmatpush1.msra.mxu0 0.0
    %1270 = vmatprep.subr.mxu0 0.0
    %1271 = vmatpush1.msra.mxu0 0.0
    %1272 = vmatprep.subr.mxu0 0.0
    %1273 = vmatpush1.msra.mxu0 0.0
    %1274 = vmatprep.subr.mxu0 0.0
    %1275 = vmatpush1.msra.mxu0 0.0
    %1276 = vmatprep.subr.mxu0 0.0
    %1277 = vmatpush1.msra.mxu0 0.0
    %1278 = vmatprep.subr.mxu0 0.0
    %1279 = vmatpush1.msra.mxu0 0.0
    %1280 = vmatprep.subr.mxu0 0.0
    %1281 = vmatpush1.msra.mxu0 0.0
    %1282 = vmatprep.subr.mxu0 0.0
    %1283 = vmatpush1.msra.mxu0 0.0
    %1284 = vmatprep.subr.mxu0 0.0
    %1285 = vmatpush1.msra.mxu0 0.0
    %1286 = vmatprep.subr.mxu0 0.0
    %1287 = vmatpush1.msra.mxu0 0.0
    %1288 = vmatprep.subr.mxu0 0.0
    %1289 = vmatpush1.msra.mxu0 0.0
    %1290 = vmatprep.subr.mxu0 0.0
    %1291 = vmatpush1.msra.mxu0 0.0
    %1292 = vmatprep.subr.mxu0 0.0
    %1293 = vmatpush1.msra.mxu0 0.0
    %1294 = vmatprep.subr.mxu0 0.0
    %1295 = vmatpush1.msra.mxu0 0.0
    %1296 = vmatprep.subr.mxu0 0.0
    %1297 = vmatpush1.msra.mxu0 0.0
    %1298 = vmatprep.mubr.f32.mxu0 0.0
    %1299 = vmatmul.mubr.f32.gmra.mrb[0].mxu0 %v409
    %v1300 = vpop.f32.mrb[0].mxu0
    %v1301 = vadd.f32 0.0, %v1300
    %v1302 = vpop.f32.mrb[0].mxu0
    %1303 = vmatprep.mubr.f32.mxu0 0.0
    %1304 = vmatmul.mubr.f32.gmra.mrb[0].mxu0 %v412
    %v1305 = vpop.f32.mrb[0].mxu0
    %v1306 = vadd.f32 0.0, %v1305
    %v1307 = vpop.f32.mrb[0].mxu0
    %1308 = vmatprep.mubr.f32.mxu0 0.0
    %1309 = vmatmul.mubr.f32.gmra.mrb[0].mxu0 %v415
    %v1310 = vpop.f32.mrb[0].mxu0
    %v1311 = vadd.f32 0.0, %v1310
    %v1312 = vpop.f32.mrb[0].mxu0
    %1313 = vmatprep.mubr.f32.mxu0 0.0
    %1314 = vmatmul.mubr.f32.gmra.mrb[0].mxu0 %v418
    %v1315 = vpop.f32.mrb[0].mxu0
    %v1316 = vadd.f32 0.0, %v1315
    %v1317 = vpop.f32.mrb[0].mxu0
    %1318 = vmatprep.mubr.f32.mxu0 0.0
    %1319 = vmatmul.mubr.f32.gmra.mrb[0].mxu0 %v421
    %v1320 = vpop.f32.mrb[0].mxu0
    %v1321 = vadd.f32 0.0, %v1320
    %v1322 = vpop.f32.mrb[0].mxu0
    %1323 = vmatprep.mubr.f32.mxu0 0.0
    %1324 = vmatmul.mubr.f32.gmra.mrb[0].mxu0 %v424
    %v1325 = vpop.f32.mrb[0].mxu0
    %v1326 = vadd.f32 0.0, %v1325
    %v1327 = vpop.f32.mrb[0].mxu0
    %1328 = vmatprep.mubr.f32.mxu0 0.0
    %1329 = vmatmul.mubr.f32.gmra.mrb[0].mxu0 %v427
    %v1330 = vpop.f32.mrb[0].mxu0
    %v1331 = vadd.f32 0.0, %v1330
    %v1332 = vpop.f32.mrb[0].mxu0
    %1333 = vmatprep.mubr.f32.mxu0 0.0
    %1334 = vmatmul.mubr.f32.gmra.mrb[0].mxu0 %v430
    %v1335 = vpop.f32.mrb[0].mxu0
    %v1336 = vadd.f32 0.0, %v1335
    %v1337 = vpop.f32.mrb[0].mxu0
    %1338 = vmatprep.mubr.f32.mxu0 0.0
    %1339 = vmatmul.mubr.f32.gmra.mrb[0].mxu0 %v433
    %v1340 = vpop.f32.mrb[0].mxu0
    %v1341 = vadd.f32 0.0, %v1340
    %v1342 = vpop.f32.mrb[0].mxu0
    %1343 = vmatprep.mubr.f32.mxu0 0.0
    %1344 = vmatmul.mubr.f32.gmra.mrb[0].mxu0 %v436
    %v1345 = vpop.f32.mrb[0].mxu0
    %v1346 = vadd.f32 0.0, %v1345
    %v1347 = vpop.f32.mrb[0].mxu0
    %1348 = vmatprep.mubr.f32.mxu0 0.0
    %1349 = vmatmul.mubr.f32.gmra.mrb[0].mxu0 %v439
    %v1350 = vpop.f32.mrb[0].mxu0
    %v1351 = vadd.f32 0.0, %v1350
    %v1352 = vpop.f32.mrb[0].mxu0
    %1353 = vmatprep.mubr.f32.mxu0 0.0
    %1354 = vmatmul.mubr.f32.gmra.mrb[0].mxu0 %v442
    %v1355 = vpop.f32.mrb[0].mxu0
    %v1356 = vadd.f32 0.0, %v1355
    %v1357 = vpop.f32.mrb[0].mxu0
    %1358 = vdwg.mxu0
    %v1359 = vld [vmem:[#allocation14] sm:$0x1]
    %v1361 = vlaneseq
    %v1362 = vshrl.u32 %v1361, 7
    %v1363 = vsub.s32 0, %v1362
    %v1364 = vrot.slane %v1359, %v1363
    %v1366 = vadd.f32 %v1301, %v1364
    %v1367 = vadd.f32 %v1306, %v1364
    %v1368 = vadd.f32 %v1311, %v1364
    %v1369 = vadd.f32 %v1316, %v1364
    %v1370 = vadd.f32 %v1321, %v1364
    %v1371 = vadd.f32 %v1326, %v1364
    %v1372 = vadd.f32 %v1331, %v1364
    %v1373 = vadd.f32 %v1336, %v1364
    %v1374 = vadd.f32 %v1341, %v1364
    %v1375 = vadd.f32 %v1346, %v1364
    %v1376 = vadd.f32 %v1351, %v1364
    %v1377 = vadd.f32 %v1356, %v1364
    %v1378 = vadd.f32 %v1366, %v590
    %v1379 = vadd.f32 %v1367, %v594
    %v1380 = vadd.f32 %v1368, %v598
    %v1381 = vadd.f32 %v1369, %v602
    %v1382 = vadd.f32 %v1370, %v606
    %v1383 = vadd.f32 %v1371, %v610
    %v1384 = vadd.f32 %v1372, %v614
    %v1385 = vadd.f32 %v1373, %v618
    %v1386 = vadd.f32 %v1374, %v622
    %v1387 = vadd.f32 %v1375, %v626
    %v1388 = vadd.f32 %v1376, %v630
    %v1389 = vadd.f32 %v1377, %v634
    %v1390 = vsel %vm328, %v1378, -inf
    %v1391 = vsel %vm328, %v1379, -inf
    %v1392 = vmax.f32 %v1390, %v1391
    %v1393 = vsel %vm328, %v1380, -inf
    %v1394 = vmax.f32 %v1392, %v1393
    %v1395 = vrot.slane %v1394, 4
    %v1396 = vmax.f32 %v1394, %v1395
    %v1397 = vrot.slane %v1396, 2
    %v1398 = vmax.f32 %v1396, %v1397
    %v1399 = vrot.slane %v1398, 1
    %v1400 = vmax.f32 %v1398, %v1399
    %v1401 = vsel %vm328, %v1381, -inf
    %v1402 = vsel %vm328, %v1382, -inf
    %v1403 = vmax.f32 %v1401, %v1402
    %v1404 = vsel %vm328, %v1383, -inf
    %v1405 = vmax.f32 %v1403, %v1404
    %v1406 = vrot.slane %v1405, 4
    %v1407 = vmax.f32 %v1405, %v1406
    %v1408 = vrot.slane %v1407, 2
    %v1409 = vmax.f32 %v1407, %v1408
    %v1410 = vrot.slane %v1409, 1
    %v1411 = vmax.f32 %v1409, %v1410
    %v1412 = vsel %vm328, %v1384, -inf
    %v1413 = vsel %vm328, %v1385, -inf
    %v1414 = vmax.f32 %v1412, %v1413
    %v1415 = vsel %vm328, %v1386, -inf
    %v1416 = vmax.f32 %v1414, %v1415
    %v1417 = vrot.slane %v1416, 4
    %v1418 = vmax.f32 %v1416, %v1417
    %v1419 = vrot.slane %v1418, 2
    %v1420 = vmax.f32 %v1418, %v1419
    %v1421 = vrot.slane %v1420, 1
    %v1422 = vmax.f32 %v1420, %v1421
    %v1423 = vsel %vm328, %v1387, -inf
    %v1424 = vsel %vm328, %v1388, -inf
    %v1425 = vmax.f32 %v1423, %v1424
    %v1426 = vsel %vm328, %v1389, -inf
    %v1427 = vmax.f32 %v1425, %v1426
    %v1428 = vrot.slane %v1427, 4
    %v1429 = vmax.f32 %v1427, %v1428
    %v1430 = vrot.slane %v1429, 2
    %v1431 = vmax.f32 %v1429, %v1430
    %v1432 = vrot.slane %v1431, 1
    %v1433 = vmax.f32 %v1431, %v1432
    %v1434 = vsub.f32 %v1400, 100.0
    %v1435 = vsub.f32 %v1411, 100.0
    %v1436 = vsub.f32 %v1422, 100.0
    %v1437 = vsub.f32 %v1433, 100.0
    %1438 = vset.pattern.permute.xlu0 1
    %1439 = vperm.xlu0 %1438, %v149
    %v1440 = vpop.permute.xlu0 %1439
    %1442 = vset.pattern.permute.xlu0 1
    %1443 = vperm.xlu0 %1442, %v150
    %v1444 = vpop.permute.xlu0 %1443
    %1446 = vset.pattern.permute.xlu0 1
    %1447 = vperm.xlu0 %1446, %v151
    %v1448 = vpop.permute.xlu0 %1447
    %1450 = vset.pattern.permute.xlu0 1
    %1451 = vperm.xlu0 %1450, %v152
    %v1452 = vpop.permute.xlu0 %1451
    %1454 = vset.pattern.permute.xlu0 1
    %1455 = vperm.xlu0 %1454, %v153
    %v1456 = vpop.permute.xlu0 %1455
    %1458 = vset.pattern.permute.xlu0 1
    %1459 = vperm.xlu0 %1458, %v154
    %v1460 = vpop.permute.xlu0 %1459
    %1462 = vset.pattern.permute.xlu0 1
    %1463 = vperm.xlu0 %1462, %v155
    %v1464 = vpop.permute.xlu0 %1463
    %1466 = vset.pattern.permute.xlu0 1
    %1467 = vperm.xlu0 %1466, %v156
    %v1468 = vpop.permute.xlu0 %1467
    %1470 = vset.pattern.permute.xlu0 1
    %1471 = vperm.xlu0 %1470, %v157
    %v1472 = vpop.permute.xlu0 %1471
    %1474 = vset.pattern.permute.xlu0 1
    %1475 = vperm.xlu0 %1474, %v158
    %v1476 = vpop.permute.xlu0 %1475
    %1478 = vset.pattern.permute.xlu0 1
    %1479 = vperm.xlu0 %1478, %v159
    %v1480 = vpop.permute.xlu0 %1479
    %1482 = vset.pattern.permute.xlu0 1
    %1483 = vperm.xlu0 %1482, %v160
    %v1484 = vpop.permute.xlu0 %1483
    %v1486 = vadd.f32 %v1366, %v1440
    %v1487 = vadd.f32 %v1367, %v1444
    %v1488 = vadd.f32 %v1368, %v1448
    %v1489 = vadd.f32 %v1369, %v1452
    %v1490 = vadd.f32 %v1370, %v1456
    %v1491 = vadd.f32 %v1371, %v1460
    %v1492 = vadd.f32 %v1372, %v1464
    %v1493 = vadd.f32 %v1373, %v1468
    %v1494 = vadd.f32 %v1374, %v1472
    %v1495 = vadd.f32 %v1375, %v1476
    %v1496 = vadd.f32 %v1376, %v1480
    %v1497 = vadd.f32 %v1377, %v1484
    %v1498 = vsel %vm328, %v1486, -inf
    %v1499 = vsel %vm328, %v1487, -inf
    %v1500 = vmax.f32 %v1498, %v1499
    %v1501 = vsel %vm328, %v1488, -inf
    %v1502 = vmax.f32 %v1500, %v1501
    %v1503 = vrot.slane %v1502, 4
    %v1504 = vmax.f32 %v1502, %v1503
    %v1505 = vrot.slane %v1504, 2
    %v1506 = vmax.f32 %v1504, %v1505
    %v1507 = vrot.slane %v1506, 1
    %v1508 = vmax.f32 %v1506, %v1507
    %v1509 = vsel %vm328, %v1489, -inf
    %v1510 = vsel %vm328, %v1490, -inf
    %v1511 = vmax.f32 %v1509, %v1510
    %v1512 = vsel %vm328, %v1491, -inf
    %v1513 = vmax.f32 %v1511, %v1512
    %v1514 = vrot.slane %v1513, 4
    %v1515 = vmax.f32 %v1513, %v1514
    %v1516 = vrot.slane %v1515, 2
    %v1517 = vmax.f32 %v1515, %v1516
    %v1518 = vrot.slane %v1517, 1
    %v1519 = vmax.f32 %v1517, %v1518
    %v1520 = vsel %vm328, %v1492, -inf
    %v1521 = vsel %vm328, %v1493, -inf
    %v1522 = vmax.f32 %v1520, %v1521
    %v1523 = vsel %vm328, %v1494, -inf
    %v1524 = vmax.f32 %v1522, %v1523
    %v1525 = vrot.slane %v1524, 4
    %v1526 = vmax.f32 %v1524, %v1525
    %v1527 = vrot.slane %v1526, 2
    %v1528 = vmax.f32 %v1526, %v1527
    %v1529 = vrot.slane %v1528, 1
    %v1530 = vmax.f32 %v1528, %v1529
    %v1531 = vsel %vm328, %v1495, -inf
    %v1532 = vsel %vm328, %v1496, -inf
    %v1533 = vmax.f32 %v1531, %v1532
    %v1534 = vsel %vm328, %v1497, -inf
    %v1535 = vmax.f32 %v1533, %v1534
    %v1536 = vrot.slane %v1535, 4
    %v1537 = vmax.f32 %v1535, %v1536
    %v1538 = vrot.slane %v1537, 2
    %v1539 = vmax.f32 %v1537, %v1538
    %v1540 = vrot.slane %v1539, 1
    %v1541 = vmax.f32 %v1539, %v1540
    %v1542 = vsub.f32 %v1508, 100.0
    %v1543 = vsub.f32 %v1519, 100.0
    %v1544 = vsub.f32 %v1530, 100.0
    %v1545 = vsub.f32 %v1541, 100.0
    %v1546 = vadd.f32 %v1366, %v1101
    %v1547 = vadd.f32 %v1367, %v1105
    %v1548 = vadd.f32 %v1368, %v1109
    %v1549 = vadd.f32 %v1369, %v1113
    %v1550 = vadd.f32 %v1370, %v1117
    %v1551 = vadd.f32 %v1371, %v1121
    %v1552 = vadd.f32 %v1372, %v1125
    %v1553 = vadd.f32 %v1373, %v1129
    %v1554 = vadd.f32 %v1374, %v1133
    %v1555 = vadd.f32 %v1375, %v1137
    %v1556 = vadd.f32 %v1376, %v1141
    %v1557 = vadd.f32 %v1377, %v1145
    %v1558 = vsel %vm328, %v1546, -inf
    %v1559 = vsel %vm328, %v1547, -inf
    %v1560 = vmax.f32 %v1558, %v1559
    %v1561 = vsel %vm328, %v1548, -inf
    %v1562 = vmax.f32 %v1560, %v1561
    %v1563 = vrot.slane %v1562, 4
    %v1564 = vmax.f32 %v1562, %v1563
    %v1565 = vrot.slane %v1564, 2
    %v1566 = vmax.f32 %v1564, %v1565
    %v1567 = vrot.slane %v1566, 1
    %v1568 = vmax.f32 %v1566, %v1567
    %v1569 = vsel %vm328, %v1549, -inf
    %v1570 = vsel %vm328, %v1550, -inf
    %v1571 = vmax.f32 %v1569, %v1570
    %v1572 = vsel %vm328, %v1551, -inf
    %v1573 = vmax.f32 %v1571, %v1572
    %v1574 = vrot.slane %v1573, 4
    %v1575 = vmax.f32 %v1573, %v1574
    %v1576 = vrot.slane %v1575, 2
    %v1577 = vmax.f32 %v1575, %v1576
    %v1578 = vrot.slane %v1577, 1
    %v1579 = vmax.f32 %v1577, %v1578
    %v1580 = vsel %vm328, %v1552, -inf
    %v1581 = vsel %vm328, %v1553, -inf
    %v1582 = vmax.f32 %v1580, %v1581
    %v1583 = vsel %vm328, %v1554, -inf
    %v1584 = vmax.f32 %v1582, %v1583
    %v1585 = vrot.slane %v1584, 4
    %v1586 = vmax.f32 %v1584, %v1585
    %v1587 = vrot.slane %v1586, 2
    %v1588 = vmax.f32 %v1586, %v1587
    %v1589 = vrot.slane %v1588, 1
    %v1590 = vmax.f32 %v1588, %v1589
    %v1591 = vsel %vm328, %v1555, -inf
    %v1592 = vsel %vm328, %v1556, -inf
    %v1593 = vmax.f32 %v1591, %v1592
    %v1594 = vsel %vm328, %v1557, -inf
    %v1595 = vmax.f32 %v1593, %v1594
    %v1596 = vrot.slane %v1595, 4
    %v1597 = vmax.f32 %v1595, %v1596
    %v1598 = vrot.slane %v1597, 2
    %v1599 = vmax.f32 %v1597, %v1598
    %v1600 = vrot.slane %v1599, 1
    %v1601 = vmax.f32 %v1599, %v1600
    %v1602 = vsub.f32 %v1568, 100.0
    %v1603 = vsub.f32 %v1579, 100.0
    %v1604 = vsub.f32 %v1590, 100.0
    %v1605 = vsub.f32 %v1601, 100.0
    %v1610 = vsel %vm820, %v1435, %v1434
    %v1611 = vsel %vm822, %v1436, %v1610
    %v1612 = vsel %vm824, %v1437, %v1611
    %v1618 = vsel %vm820, %v1543, %v1542
    %v1619 = vsel %vm822, %v1544, %v1618
    %v1620 = vsel %vm824, %v1545, %v1619
    %1621 = vrot.lane.b32.xlu0 %v1620, 32
    %v1622 = vpop.permute.xlu0 %1621
    %v1628 = vsel %vm820, %v1603, %v1602
    %v1629 = vsel %vm822, %v1604, %v1628
    %v1630 = vsel %vm824, %v1605, %v1629
    %1631 = vrot.lane.b32.xlu0 %v1630, 64
    %v1632 = vpop.permute.xlu0 %1631
    %v1634 = vsel %vm328, %v1612, %v1622
    %vm1635 = vcmask 523264
    %v1636 = vsel %vm1635, %v1634, %v1632
    %v1637 = vmax.f32 %v1636, 0.0
    %vm1638 = vcmask 781312
    %1639 = vst.msk [vmem:[#allocation19] sm:$0xf] %vm1638, %v1637
    // Predicated region
    $region66: #{semantic_embedding_forward.2} parent=1 // pred_check
      _
    $region67: #{semantic_embedding_forward.2} parent=1 // pred_check_branch
      %1641 = sbr.rel (0) target = $region69
    $region68: #{semantic_embedding_forward.2} parent=1 // pred_region
      %s1643 = ssub.s32 64, 64
      %1644 = vsyncadd [#allocation4], %s1643
      %s1646 = sshll.u32 [#allocation16], 4
      %s1647 = int_to_ptr.vmem [resolvable:$true] %s1646
      %1649 = dma.vmem_to_hbm [thread:$0]  %s1647, 64, %s8, [#allocation4]
    $region69: #{semantic_embedding_forward.2} parent=1 // pred_fallthru
      _
    // Predicated region
    $region70: #{semantic_embedding_forward.2} parent=1 // pred_check
      _
    $region71: #{semantic_embedding_forward.2} parent=1 // pred_check_branch
      %1651 = sbr.rel (0) target = $region73
    $region72: #{semantic_embedding_forward.2} parent=1 // pred_region
      %s1653 = ssub.s32 64, 64
      %1654 = vsyncadd [#allocation18], %s1653
      %s1656 = sshll.u32 [#allocation17], 4
      %s1657 = int_to_ptr.vmem [resolvable:$true] %s1656
      %1659 = dma.vmem_to_hbm [thread:$0]  %s1657, 64, %s9, [#allocation18]
    $region73: #{semantic_embedding_forward.2} parent=1 // pred_fallthru
      _
    // Predicated region
    $region74: #{semantic_embedding_forward.2} parent=1 // pred_check
      _
    $region75: #{semantic_embedding_forward.2} parent=1 // pred_check_branch
      %1661 = sbr.rel (0) target = $region77
    $region76: #{semantic_embedding_forward.2} parent=1 // pred_region
      %s1663 = ssub.s32 64, 64
      %1664 = vsyncadd [#allocation18], %s1663
      %s1666 = sshll.u32 [#allocation19], 4
      %s1667 = int_to_ptr.vmem [resolvable:$true] %s1666
      %1669 = dma.vmem_to_hbm [thread:$0]  %s1667, 64, %s10, [#allocation18]
    $region77: #{semantic_embedding_forward.2} parent=1 // pred_fallthru
      _
    // Predicated region
    $region78: #{semantic_embedding_forward.2} parent=1 // pred_check
      _
    $region79: #{semantic_embedding_forward.2} parent=1 // pred_check_branch
      %1671 = sbr.rel (0) target = $region81
    $region80: #{semantic_embedding_forward.2} parent=1 // pred_region
      %1672 = dma.done [#allocation4], 64
    $region81: #{semantic_embedding_forward.2} parent=1 // pred_fallthru
      _
    // Predicated region
    $region82: #{semantic_embedding_forward.2} parent=1 // pred_check
      _
    $region83: #{semantic_embedding_forward.2} parent=1 // pred_check_branch
      %1674 = sbr.rel (0) target = $region85
    $region84: #{semantic_embedding_forward.2} parent=1 // pred_region
      %1675 = dma.done [#allocation18], 64
    $region85: #{semantic_embedding_forward.2} parent=1 // pred_fallthru
      _
    // Predicated region
    $region86: #{semantic_embedding_forward.2} parent=1 // pred_check
      _
    $region87: #{semantic_embedding_forward.2} parent=1 // pred_check_branch
      %1677 = sbr.rel (0) target = $region89
    $region88: #{semantic_embedding_forward.2} parent=1 // pred_region
      %1678 = dma.done [#allocation18], 64
    $region89: #{semantic_embedding_forward.2} parent=1 // pred_fallthru
      _
    %1679 = vsyncpa [#allocation3], 1
    %1680 = vsyncpa [#allocation6], 1
    %1681 = vsyncpa [#allocation9], 1
    %1682 = vsyncpa [#allocation12], 1
    %1683 = vsyncpa [#allocation15], 1
    %1684 = vsyncpa [#allocation4], 1
    %1685 = vsyncpa [#allocation18], 1

</llo_original>
